<compile_context>
chip_gen: v7x
topology: tpu7x:2x2x1
jax: 0.10.0
libtpu: 0.0.40
codegen_flags: <defaults>
</compile_context>

<pallas_src>
import math

import jax
import jax.numpy as jnp
from jax import lax
from jax.experimental import pallas as pl
from jax.experimental.pallas import tpu as pltpu


def _sgru_cell_kernel(idx_ref, mask_ref, x_ref, h_ref, hpos_ref,
                      sbias_ref, vgW_ref, vgw_ref,
                      p0n_ref, whu_ref, uau_ref, uw_ref,
                      wn_ref, W_ref, Ux_ref, Uh_ref,
                      wlo_ref, ux_ref, uh_ref,
                      out_ref):
    Bb, S, N = mask_ref.shape
    H = h_ref.shape[-1]
    In = x_ref.shape[-1]
    M = Bb * S
    f32 = jnp.float32

    idx = idx_ref[...]                               # (Bb,S,N) int32
    mask = mask_ref[...]                             # (Bb,S,N) 0/1 float
    x3 = x_ref[...]                                  # (Bb,S,In)
    h3 = h_ref[...]                                  # (Bb,S,H)
    hp3 = h3 + hpos_ref[...][None]                   # h_s + pos_{s+1}
    x2 = x3.reshape(M, In)
    h2 = h3.reshape(M, H)
    hp2 = hp3.reshape(M, H)
    uw = uw_ref[...]                                 # (1,H) row of the u-scorer weight

    # ---------------- Neighbor attention ----------------
    # proj_j = Wn(new_h_j + pos_j):  j>=1 -> Wn(h_{j-1} + pos_j) == pproj3[:, j-1],
    #                                j==0 -> Wn(pos_0)           == p0n (batch independent).
    pproj2 = jnp.dot(hp2, wn_ref[...], preferred_element_type=f32)     # (M,H)
    pproj3 = pproj2.reshape(Bb, S, H)
    p0n = p0n_ref[...]                                                 # (1,H)

    # score(s,n) = u(base_s) + mask * (proj_{idx} . uw): the u(.) dot is distributed so
    # the (S,N,H) tensor `s` is never materialized; base only feeds this rank-1 score,
    # so its Wh/Ua parts collapse to the precomputed matvec rows whu/uau and its
    # (V(g)+b).uw + u.bias term is the per-batch scalar sbias.
    sb = (jnp.sum(hp3 * whu_ref[...][None], axis=-1)
          + jnp.sum(x3 * uau_ref[...][None], axis=-1)
          + sbias_ref[...][:, :, 0])                                   # (Bb,S)
    pproj_u = jnp.sum(pproj3 * uw[None], axis=-1)                      # (Bb,S)
    p0_u = jnp.sum(p0n * uw)                                           # scalar

    is0 = (idx == 0).astype(f32)                                       # virtual zero node
    jj = lax.broadcasted_iota(jnp.int32, (Bb, S, N, S), 3) + 1         # j = 1..S
    moh = (idx[..., None] == jj).astype(f32) * mask[..., None]         # masked one-hot

    nb = (jnp.sum(moh * pproj_u[:, None, None, :], axis=-1)
          + is0 * mask * p0_u)                                         # (Bb,S,N)
    score = sb[..., None] + nb
    score = jnp.where(mask != 0.0, score, f32(-1e9))
    score = score - jnp.max(score, axis=-1, keepdims=True)
    p = jnp.exp(score)
    p = p * pl.reciprocal(jnp.sum(p, axis=-1, keepdims=True), approx=True)

    # hn = sum_n p * neighbors, with the row gather folded into a small batched matmul.
    wgt = jnp.sum(p[..., None] * moh, axis=2)                          # (Bb,S,S)
    w0 = jnp.sum(p * is0 * mask, axis=-1)                              # (Bb,S)
    hn3 = (jnp.einsum('bsj,bjh->bsh', wgt, pproj3, preferred_element_type=f32)
           + w0[..., None] * p0n[None])                                # (Bb,S,H)
    hn2 = hn3.reshape(M, H)

    # ---------------- GRU update ----------------
    # gates = sigmoid(W h + U [x, hn] + V g + b)   (U split into its x / hn halves)
    gpre = (jnp.dot(h2, W_ref[...], preferred_element_type=f32)
            + jnp.dot(x2, Ux_ref[...], preferred_element_type=f32)
            + jnp.dot(hn2, Uh_ref[...], preferred_element_type=f32)
            ).reshape(Bb, S, 2 * H) + vgW_ref[...]
    gates = 1.0 / (1.0 + jnp.exp(-gpre))
    z = gates[..., :H]
    r = gates[..., H:]

    # ht = tanh(w (r*h) + u [x, hn] + v g + b)
    rh2 = (r * h3).reshape(M, H)
    cpre = (jnp.dot(rh2, wlo_ref[...], preferred_element_type=f32)
            + jnp.dot(x2, ux_ref[...], preferred_element_type=f32)
            + jnp.dot(hn2, uh_ref[...], preferred_element_type=f32)
            ).reshape(Bb, S, H) + vgw_ref[...]
    ht = jnp.tanh(cpre)

    out_ref[...] = (1.0 - z) * h3 + z * ht


def sgru_cell_pallas(x, h, g, neighbor_index, neighbor_mask, params, *, block_b=8):
    B, S, In = x.shape
    H = h.shape[-1]
    N = neighbor_index.shape[-1]
    f32 = jnp.float32

    pos = params['pos_emb']
    assert pos.shape[0] >= S + 1, "position table must cover indices 0..S"

    # ---- cheap per-call precompute in XLA (hoisted out of the kernel) ----
    hpos = pos[1:S + 1].astype(f32)                          # (S,H) pos-emb of sentences
    uw = params['uw']                                        # (H,1)
    p0n = (pos[0:1] @ params['Wn_a']).astype(f32)            # (1,H) = Wn(0 + pos_0)
    whu = (params['Wh_a'] @ uw).reshape(1, H)                # (1,H)  Wh . u   (score matvec)
    uau = (params['Ua'] @ uw).reshape(1, In)                 # (1,In) Ua . u
    uw_row = uw.reshape(1, H)
    # per-batch g projections: one XLA matmul each, plus the attention scalar bias
    sbias = ((g @ params['Va'] + params['Vab']) @ uw + params['ub']).reshape(B, 1, 1)
    vgW = (g @ params['V2'] + params['V2b'])[:, None, :]     # (B,1,2H)
    vgw = (g @ params['v2'] + params['v2b'])[:, None, :]     # (B,1,H)
    # split the concat([x, hn]) projections of the GRU into their x / hn halves
    Ux, Uh = params['U2'][:In], params['U2'][In:]
    ux, uh = params['u2'][:In], params['u2'][In:]

    idx = neighbor_index.astype(jnp.int32)
    maskf = neighbor_mask.astype(f32)
    x = x.astype(f32)
    h = h.astype(f32)

    # Largest batch block <= block_b that divides B (avoids padded work; keeps grid>=1).
    Bb = max(1, min(block_b, B))
    while B % Bb:
        Bb -= 1

    grid_spec = pltpu.PrefetchScalarGridSpec(
        num_scalar_prefetch=0,
        grid=(B // Bb,),
        in_specs=[
            pl.BlockSpec((Bb, S, N), lambda b: (b, 0, 0)),        # neighbor_index (int32)
            pl.BlockSpec((Bb, S, N), lambda b: (b, 0, 0)),        # neighbor_mask
            pl.BlockSpec((Bb, S, In), lambda b: (b, 0, 0)),       # x
            pl.BlockSpec((Bb, S, H), lambda b: (b, 0, 0)),        # h
            pl.BlockSpec((S, H), lambda b: (0, 0)),               # hpos (shared)
            pl.BlockSpec((Bb, 1, 1), lambda b: (b, 0, 0)),        # attn scalar bias
            pl.BlockSpec((Bb, 1, 2 * H), lambda b: (b, 0, 0)),    # V(g)+b (gates)
            pl.BlockSpec((Bb, 1, H), lambda b: (b, 0, 0)),        # v(g)+b (candidate)
            pl.BlockSpec((1, H), lambda b: (0, 0)),               # p0n
            pl.BlockSpec((1, H), lambda b: (0, 0)),               # whu
            pl.BlockSpec((1, In), lambda b: (0, 0)),              # uau
            pl.BlockSpec((1, H), lambda b: (0, 0)),               # uw row
            pl.BlockSpec((H, H), lambda b: (0, 0)),               # Wn
            pl.BlockSpec((H, 2 * H), lambda b: (0, 0)),           # W
            pl.BlockSpec((In, 2 * H), lambda b: (0, 0)),          # Ux
            pl.BlockSpec((H, 2 * H), lambda b: (0, 0)),           # Uh
            pl.BlockSpec((H, H), lambda b: (0, 0)),               # w
            pl.BlockSpec((In, H), lambda b: (0, 0)),              # ux
            pl.BlockSpec((H, H), lambda b: (0, 0)),               # uh
        ],
        out_specs=pl.BlockSpec((Bb, S, H), lambda b: (b, 0, 0)),
    )

    h_new = pl.pallas_call(
        _sgru_cell_kernel,
        out_shape=jax.ShapeDtypeStruct((B, S, H), f32),
        grid_spec=grid_spec,
        compiler_params=pltpu.CompilerParams(
            dimension_semantics=("parallel",)),
    )(idx, maskf, x, h, hpos, sbias, vgW, vgw,
      p0n, whu, uau, uw_row, params['Wn_a'],
      params['W'], Ux, Uh, params['w_'], ux, uh)
    return h_new


def sgru_cell_reference(x, h, g, neighbor_index, neighbor_mask, params):
    """Pure-JAX mirror of the PyTorch SGRUCell.forward (for correctness check)."""
    B, S, In = x.shape
    H = h.shape[-1]
    pos = params['pos_emb']
    maskf = neighbor_mask.astype(jnp.float32)

    # Neighbor_Attn
    pos_emb = pos[neighbor_index]                                     # (B,S,N,H)
    new_h = jnp.concatenate([jnp.zeros((B, 1, H), h.dtype), h], 1)    # (B,S+1,H)
    gathered = new_h[jnp.arange(B)[:, None, None], neighbor_index] + pos_emb
    neighbors = (gathered @ params['Wn_a']) * maskf[..., None]
    h_pos = pos[1:S + 1][None]
    base = ((h + h_pos) @ params['Wh_a'] + x @ params['Ua']
            + (g @ params['Va'] + params['Vab'])[:, None, :])
    s = base[:, :, None, :] + neighbors
    score = jnp.squeeze(s @ params['uw'], -1) + params['ub']
    score = jnp.where(maskf == 0, -1e9, score)
    p = jax.nn.softmax(score, axis=-1)
    hn = jnp.sum(p[..., None] * neighbors, axis=2)

    # SGRU update
    xc = jnp.concatenate([x, hn], -1)
    gates = jax.nn.sigmoid(h @ params['W'] + xc @ params['U2']
                           + (g @ params['V2'] + params['V2b'])[:, None, :])
    z, r = gates[..., :H], gates[..., H:]
    ht = jnp.tanh((r * h) @ params['w_'] + xc @ params['u2']
                  + (g @ params['v2'] + params['v2b'])[:, None, :])
    return (1.0 - z) * h + z * ht


def init_params(key, input_size, hidden_size, num_pos):
    H, In = hidden_size, input_size
    ks = jax.random.split(key, 16)

    def lin(k, fan_in, shape):
        s = 1.0 / math.sqrt(fan_in)
        return jax.random.uniform(k, shape, jnp.float32, -s, s)

    return {
        # Neighbor_Attn (weights pre-transposed to (in, out))
        'Wh_a': lin(ks[0], H, (H, H)),
        'Wn_a': lin(ks[1], H, (H, H)),
        'Ua':   lin(ks[2], In, (In, H)),
        'uw':   lin(ks[3], H, (H, 1)),
        'ub':   lin(ks[4], H, ()),
        'Va':   lin(ks[5], H, (H, H)),
        'Vab':  lin(ks[6], H, (H,)),
        # SGRUCell
        'W':    lin(ks[7], H, (H, 2 * H)),
        'U2':   lin(ks[8], In + H, (In + H, 2 * H)),
        'V2':   lin(ks[9], H, (H, 2 * H)),
        'V2b':  lin(ks[10], H, (2 * H,)),
        'w_':   lin(ks[11], H, (H, H)),
        'u2':   lin(ks[12], In + H, (In + H, H)),
        'v2':   lin(ks[13], H, (H, H)),
        'v2b':  lin(ks[14], H, (H,)),
        # position encoding table (nn.Embedding(num_pos, H))
        'pos_emb': jax.random.normal(ks[15], (num_pos, H), jnp.float32) * 0.1,
    }


if __name__ == "__main__":
    B, S, N, H, In = 2, 8, 4, 32, 32

    key = jax.random.PRNGKey(0)
    kx, kh, kg, ki, km, kp = jax.random.split(key, 6)
    x = jax.random.normal(kx, (B, S, In), jnp.float32)
    h = jax.random.normal(kh, (B, S, H), jnp.float32)
    g = jax.random.normal(kg, (B, H), jnp.float32)
    neighbor_index = jax.random.randint(ki, (B, S, N), 0, S + 1, jnp.int32)
    neighbor_mask = jax.random.bernoulli(km, 0.7, (B, S, N)).astype(jnp.int32)
    neighbor_mask = neighbor_mask.at[:, :, 0].set(1)   # at least one valid neighbor

    params = init_params(kp, In, H, num_pos=S + 1)

    h_new = sgru_cell_pallas(x, h, g, neighbor_index, neighbor_mask, params)
    jax.block_until_ready(h_new)

    h_ref = sgru_cell_reference(x, h, g, neighbor_index, neighbor_mask, params)
    err = float(jnp.max(jnp.abs(h_new - h_ref)))
    # 5e-3 tolerance leaves headroom for pl.reciprocal(approx=True) in the softmax;
    # real bugs (wrong gather / weight) show up as O(0.1-1) errors.
    assert h_new.shape == h_ref.shape
    assert jnp.allclose(h_new, h_ref, rtol=5e-3, atol=5e-3), f"mismatch, max abs err={err}"

    print("KERNEL_OK")
</pallas_src>

<mosaic_0001>
module attributes {stable_mosaic.version = 11 : i64} {
  func.func @_sgru_cell_kernel(%arg0: i32, %arg1: memref<2x8x4xi32, #tpu.memory_space<vmem>>, %arg2: memref<2x8x4xf32, #tpu.memory_space<vmem>>, %arg3: memref<2x8x32xf32, #tpu.memory_space<vmem>>, %arg4: memref<2x8x32xf32, #tpu.memory_space<vmem>>, %arg5: memref<8x32xf32, #tpu.memory_space<vmem>>, %arg6: memref<2x1x1xf32, #tpu.memory_space<vmem>>, %arg7: memref<2x1x64xf32, #tpu.memory_space<vmem>>, %arg8: memref<2x1x32xf32, #tpu.memory_space<vmem>>, %arg9: memref<1x32xf32, #tpu.memory_space<vmem>>, %arg10: memref<1x32xf32, #tpu.memory_space<vmem>>, %arg11: memref<1x32xf32, #tpu.memory_space<vmem>>, %arg12: memref<1x32xf32, #tpu.memory_space<vmem>>, %arg13: memref<32x32xf32, #tpu.memory_space<vmem>>, %arg14: memref<32x64xf32, #tpu.memory_space<vmem>>, %arg15: memref<32x64xf32, #tpu.memory_space<vmem>>, %arg16: memref<32x64xf32, #tpu.memory_space<vmem>>, %arg17: memref<32x32xf32, #tpu.memory_space<vmem>>, %arg18: memref<32x32xf32, #tpu.memory_space<vmem>>, %arg19: memref<32x32xf32, #tpu.memory_space<vmem>>, %arg20: memref<2x8x32xf32, #tpu.memory_space<vmem>>) attributes {dimension_semantics = [#tpu.dimension_semantics<parallel>], iteration_bounds = array<i64: 1>, scalar_prefetch = 0 : i64, scratch_operands = 0 : i64, tpu.core_type = #tpu.core_type<tc>, window_params = [{transform_indices = @transform_0, window_bounds = array<i64: 2, 8, 4>}, {transform_indices = @transform_1, window_bounds = array<i64: 2, 8, 4>}, {transform_indices = @transform_2, window_bounds = array<i64: 2, 8, 32>}, {transform_indices = @transform_3, window_bounds = array<i64: 2, 8, 32>}, {pipeline_mode = #tpu.pipeline_mode<synchronous>, transform_indices = @transform_4, window_bounds = array<i64: 8, 32>}, {transform_indices = @transform_5, window_bounds = array<i64: 2, 1, 1>}, {transform_indices = @transform_6, window_bounds = array<i64: 2, 1, 64>}, {transform_indices = @transform_7, window_bounds = array<i64: 2, 1, 32>}, {pipeline_mode = #tpu.pipeline_mode<synchronous>, transform_indices = @transform_8, window_bounds = array<i64: 1, 32>}, {pipeline_mode = #tpu.pipeline_mode<synchronous>, transform_indices = @transform_9, window_bounds = array<i64: 1, 32>}, {pipeline_mode = #tpu.pipeline_mode<synchronous>, transform_indices = @transform_10, window_bounds = array<i64: 1, 32>}, {pipeline_mode = #tpu.pipeline_mode<synchronous>, transform_indices = @transform_11, window_bounds = array<i64: 1, 32>}, {pipeline_mode = #tpu.pipeline_mode<synchronous>, transform_indices = @transform_12, window_bounds = array<i64: 32, 32>}, {pipeline_mode = #tpu.pipeline_mode<synchronous>, transform_indices = @transform_13, window_bounds = array<i64: 32, 64>}, {pipeline_mode = #tpu.pipeline_mode<synchronous>, transform_indices = @transform_14, window_bounds = array<i64: 32, 64>}, {pipeline_mode = #tpu.pipeline_mode<synchronous>, transform_indices = @transform_15, window_bounds = array<i64: 32, 64>}, {pipeline_mode = #tpu.pipeline_mode<synchronous>, transform_indices = @transform_16, window_bounds = array<i64: 32, 32>}, {pipeline_mode = #tpu.pipeline_mode<synchronous>, transform_indices = @transform_17, window_bounds = array<i64: 32, 32>}, {pipeline_mode = #tpu.pipeline_mode<synchronous>, transform_indices = @transform_18, window_bounds = array<i64: 32, 32>}, {transform_indices = @transform_19, window_bounds = array<i64: 2, 8, 32>}]} {
    %c0 = arith.constant 0 : index
    %c0_0 = arith.constant 0 : index
    %c0_1 = arith.constant 0 : index
    %0 = vector.load %arg1[%c0, %c0_0, %c0_1] : memref<2x8x4xi32, #tpu.memory_space<vmem>>, vector<2x8x4xi32>
    %c0_2 = arith.constant 0 : index
    %c0_3 = arith.constant 0 : index
    %c0_4 = arith.constant 0 : index
    %1 = vector.load %arg2[%c0_2, %c0_3, %c0_4] : memref<2x8x4xf32, #tpu.memory_space<vmem>>, vector<2x8x4xf32>
    %c0_5 = arith.constant 0 : index
    %c0_6 = arith.constant 0 : index
    %c0_7 = arith.constant 0 : index
    %2 = vector.load %arg3[%c0_5, %c0_6, %c0_7] : memref<2x8x32xf32, #tpu.memory_space<vmem>>, vector<2x8x32xf32>
    %c0_8 = arith.constant 0 : index
    %c0_9 = arith.constant 0 : index
    %c0_10 = arith.constant 0 : index
    %3 = vector.load %arg4[%c0_8, %c0_9, %c0_10] : memref<2x8x32xf32, #tpu.memory_space<vmem>>, vector<2x8x32xf32>
    %c0_11 = arith.constant 0 : index
    %c0_12 = arith.constant 0 : index
    %4 = vector.load %arg5[%c0_11, %c0_12] : memref<8x32xf32, #tpu.memory_space<vmem>>, vector<8x32xf32>
    %5 = vector.shape_cast %4 : vector<8x32xf32> to vector<1x8x32xf32>
    %6 = vector.broadcast %5 : vector<1x8x32xf32> to vector<2x8x32xf32>
    %7 = arith.addf %3, %6 : vector<2x8x32xf32>
    %8 = vector.shape_cast %2 : vector<2x8x32xf32> to vector<16x32xf32>
    %9 = vector.shape_cast %3 : vector<2x8x32xf32> to vector<16x32xf32>
    %10 = vector.shape_cast %7 : vector<2x8x32xf32> to vector<16x32xf32>
    %c0_13 = arith.constant 0 : index
    %c0_14 = arith.constant 0 : index
    %11 = vector.load %arg12[%c0_13, %c0_14] : memref<1x32xf32, #tpu.memory_space<vmem>>, vector<1x32xf32>
    %c0_15 = arith.constant 0 : index
    %c0_16 = arith.constant 0 : index
    %12 = vector.load %arg13[%c0_15, %c0_16] : memref<32x32xf32, #tpu.memory_space<vmem>>, vector<32x32xf32>
    %cst = arith.constant dense<0.000000e+00> : vector<16x32xf32>
    %13 = tpu.matmul %10, %12, %cst {dimension_numbers = #tpu.dot_dimension_numbers<[1], [0], [0], [1], [0, 0, 1, 1], [], []>} : vector<16x32xf32>, vector<32x32xf32>, vector<16x32xf32> -> vector<16x32xf32>
    %14 = vector.shape_cast %13 : vector<16x32xf32> to vector<2x8x32xf32>
    %c0_17 = arith.constant 0 : index
    %c0_18 = arith.constant 0 : index
    %15 = vector.load %arg9[%c0_17, %c0_18] : memref<1x32xf32, #tpu.memory_space<vmem>>, vector<1x32xf32>
    %c0_19 = arith.constant 0 : index
    %c0_20 = arith.constant 0 : index
    %16 = vector.load %arg10[%c0_19, %c0_20] : memref<1x32xf32, #tpu.memory_space<vmem>>, vector<1x32xf32>
    %17 = vector.shape_cast %16 : vector<1x32xf32> to vector<1x1x32xf32>
    %18 = vector.broadcast %17 : vector<1x1x32xf32> to vector<2x8x32xf32>
    %19 = arith.mulf %7, %18 : vector<2x8x32xf32>
    %cst_21 = arith.constant dense<0.000000e+00> : vector<2x8xf32>
    %20 = vector.multi_reduction <add>, %19, %cst_21 [2] : vector<2x8x32xf32> to vector<2x8xf32>
    %c0_22 = arith.constant 0 : index
    %c0_23 = arith.constant 0 : index
    %21 = vector.load %arg11[%c0_22, %c0_23] : memref<1x32xf32, #tpu.memory_space<vmem>>, vector<1x32xf32>
    %22 = vector.shape_cast %21 : vector<1x32xf32> to vector<1x1x32xf32>
    %23 = vector.broadcast %22 : vector<1x1x32xf32> to vector<2x8x32xf32>
    %24 = arith.mulf %2, %23 : vector<2x8x32xf32>
    %cst_24 = arith.constant dense<0.000000e+00> : vector<2x8xf32>
    %25 = vector.multi_reduction <add>, %24, %cst_24 [2] : vector<2x8x32xf32> to vector<2x8xf32>
    %26 = arith.addf %20, %25 : vector<2x8xf32>
    %c0_25 = arith.constant 0 : index
    %c0_26 = arith.constant 0 : index
    %c0_27 = arith.constant 0 : index
    %27 = vector.load %arg6[%c0_25, %c0_26, %c0_27] : memref<2x1x1xf32, #tpu.memory_space<vmem>>, vector<2x1x1xf32>
    %28 = vector.shape_cast %27 : vector<2x1x1xf32> to vector<2x1xf32>
    %29 = vector.broadcast %28 : vector<2x1xf32> to vector<2x8xf32>
    %30 = arith.addf %26, %29 : vector<2x8xf32>
    %31 = vector.shape_cast %11 : vector<1x32xf32> to vector<1x1x32xf32>
    %32 = vector.broadcast %31 : vector<1x1x32xf32> to vector<2x8x32xf32>
    %33 = arith.mulf %14, %32 : vector<2x8x32xf32>
    %cst_28 = arith.constant dense<0.000000e+00> : vector<2x8xf32>
    %34 = vector.multi_reduction <add>, %33, %cst_28 [2] : vector<2x8x32xf32> to vector<2x8xf32>
    %35 = arith.mulf %15, %11 : vector<1x32xf32>
    %36 = vector.shape_cast %35 : vector<1x32xf32> to vector<1x1x32xf32>
    %cst_29 = arith.constant dense<0.000000e+00> : vector<1xf32>
    %37 = vector.multi_reduction <add>, %36, %cst_29 [1, 2] : vector<1x1x32xf32> to vector<1xf32>
    %38 = vector.shape_cast %37 : vector<1xf32> to vector<1x1x1xf32>
    %39 = vector.extract %38[0, 0, 0] : f32 from vector<1x1x1xf32>
    %c0_i32 = arith.constant 0 : i32
    %40 = vector.broadcast %c0_i32 : i32 to vector<2x8x4xi32>
    %41 = arith.cmpi eq, %0, %40 : vector<2x8x4xi32>
    %42 = arith.extui %41 : vector<2x8x4xi1> to vector<2x8x4xi32>
    %43 = arith.sitofp %42 : vector<2x8x4xi32> to vector<2x8x4xf32>
    %44 = tpu.iota {dimensions = array<i32: 3>} : vector<2x8x4x8xi32>
    %c1_i32 = arith.constant 1 : i32
    %45 = vector.broadcast %c1_i32 : i32 to vector<2x8x4x8xi32>
    %46 = arith.addi %44, %45 : vector<2x8x4x8xi32>
    %47 = vector.shape_cast %0 : vector<2x8x4xi32> to vector<2x8x4x1xi32>
    %48 = vector.broadcast %47 : vector<2x8x4x1xi32> to vector<2x8x4x8xi32>
    %49 = arith.cmpi eq, %48, %46 : vector<2x8x4x8xi32>
    %50 = arith.extui %49 : vector<2x8x4x8xi1> to vector<2x8x4x8xi32>
    %51 = arith.sitofp %50 : vector<2x8x4x8xi32> to vector<2x8x4x8xf32>
    %52 = vector.shape_cast %1 : vector<2x8x4xf32> to vector<2x8x4x1xf32>
    %53 = vector.broadcast %52 : vector<2x8x4x1xf32> to vector<2x8x4x8xf32>
    %54 = arith.mulf %51, %53 : vector<2x8x4x8xf32>
    %55 = vector.shape_cast %34 : vector<2x8xf32> to vector<2x1x1x8xf32>
    %56 = vector.broadcast %55 : vector<2x1x1x8xf32> to vector<2x8x4x8xf32>
    %57 = arith.mulf %54, %56 : vector<2x8x4x8xf32>
    %cst_30 = arith.constant dense<0.000000e+00> : vector<2x8x4xf32>
    %58 = vector.multi_reduction <add>, %57, %cst_30 [3] : vector<2x8x4x8xf32> to vector<2x8x4xf32>
    %59 = arith.mulf %43, %1 : vector<2x8x4xf32>
    %60 = vector.broadcast %39 : f32 to vector<2x8x4xf32>
    %61 = arith.mulf %59, %60 : vector<2x8x4xf32>
    %62 = arith.addf %58, %61 : vector<2x8x4xf32>
    %63 = vector.shape_cast %30 : vector<2x8xf32> to vector<2x8x1xf32>
    %64 = vector.broadcast %63 : vector<2x8x1xf32> to vector<2x8x4xf32>
    %65 = arith.addf %64, %62 : vector<2x8x4xf32>
    %cst_31 = arith.constant 0.000000e+00 : f32
    %66 = vector.broadcast %cst_31 : f32 to vector<2x8x4xf32>
    %67 = arith.cmpf one, %1, %66 : vector<2x8x4xf32>
    %cst_32 = arith.constant -1.000000e+09 : f32
    %68 = vector.broadcast %cst_32 : f32 to vector<2x8x4xf32>
    %69 = arith.select %67, %65, %68 : vector<2x8x4xi1>, vector<2x8x4xf32>
    %cst_33 = arith.constant dense<0xFF800000> : vector<2x8xf32>
    %70 = vector.multi_reduction <maximumf>, %69, %cst_33 [2] : vector<2x8x4xf32> to vector<2x8xf32>
    %71 = vector.shape_cast %70 : vector<2x8xf32> to vector<2x8x1xf32>
    %72 = vector.broadcast %71 : vector<2x8x1xf32> to vector<2x8x4xf32>
    %73 = arith.subf %69, %72 : vector<2x8x4xf32>
    %74 = math.exp %73 : vector<2x8x4xf32>
    %cst_34 = arith.constant dense<0.000000e+00> : vector<2x8xf32>
    %75 = vector.multi_reduction <add>, %74, %cst_34 [2] : vector<2x8x4xf32> to vector<2x8xf32>
    %76 = vector.shape_cast %75 : vector<2x8xf32> to vector<2x8x1xf32>
    %77 = tpu.reciprocal %76 {approx = true} : vector<2x8x1xf32> -> vector<2x8x1xf32>
    %78 = vector.broadcast %77 : vector<2x8x1xf32> to vector<2x8x4xf32>
    %79 = arith.mulf %74, %78 : vector<2x8x4xf32>
    %80 = vector.shape_cast %79 : vector<2x8x4xf32> to vector<2x8x4x1xf32>
    %81 = vector.broadcast %80 : vector<2x8x4x1xf32> to vector<2x8x4x8xf32>
    %82 = arith.mulf %81, %54 : vector<2x8x4x8xf32>
    %cst_35 = arith.constant dense<0.000000e+00> : vector<2x8x8xf32>
    %83 = vector.multi_reduction <add>, %82, %cst_35 [2] : vector<2x8x4x8xf32> to vector<2x8x8xf32>
    %84 = arith.mulf %79, %43 : vector<2x8x4xf32>
    %85 = arith.mulf %84, %1 : vector<2x8x4xf32>
    %cst_36 = arith.constant dense<0.000000e+00> : vector<2x8xf32>
    %86 = vector.multi_reduction <add>, %85, %cst_36 [2] : vector<2x8x4xf32> to vector<2x8xf32>
    "tpu.trace_start"() <{level = 10 : i32, message = "bsj,bjh->bsh"}> : () -> ()
    %cst_37 = arith.constant dense<0.000000e+00> : vector<2x8x32xf32>
    %87 = tpu.matmul %83, %14, %cst_37 {dimension_numbers = #tpu.dot_dimension_numbers<[2], [1], [1], [2], [0, 0, 0, 1, 1, 2], [0], [0]>} : vector<2x8x8xf32>, vector<2x8x32xf32>, vector<2x8x32xf32> -> vector<2x8x32xf32>
    "tpu.trace_stop"() : () -> ()
    %88 = vector.shape_cast %86 : vector<2x8xf32> to vector<2x8x1xf32>
    %89 = vector.shape_cast %15 : vector<1x32xf32> to vector<1x1x32xf32>
    %90 = vector.broadcast %88 : vector<2x8x1xf32> to vector<2x8x32xf32>
    %91 = vector.broadcast %89 : vector<1x1x32xf32> to vector<2x8x32xf32>
    %92 = arith.mulf %90, %91 : vector<2x8x32xf32>
    %93 = arith.addf %87, %92 : vector<2x8x32xf32>
    %94 = vector.shape_cast %93 : vector<2x8x32xf32> to vector<16x32xf32>
    %c0_38 = arith.constant 0 : index
    %c0_39 = arith.constant 0 : index
    %95 = vector.load %arg14[%c0_38, %c0_39] : memref<32x64xf32, #tpu.memory_space<vmem>>, vector<32x64xf32>
    %cst_40 = arith.constant dense<0.000000e+00> : vector<16x64xf32>
    %96 = tpu.matmul %9, %95, %cst_40 {dimension_numbers = #tpu.dot_dimension_numbers<[1], [0], [0], [1], [0, 0, 1, 1], [], []>} : vector<16x32xf32>, vector<32x64xf32>, vector<16x64xf32> -> vector<16x64xf32>
    %c0_41 = arith.constant 0 : index
    %c0_42 = arith.constant 0 : index
    %97 = vector.load %arg15[%c0_41, %c0_42] : memref<32x64xf32, #tpu.memory_space<vmem>>, vector<32x64xf32>
    %cst_43 = arith.constant dense<0.000000e+00> : vector<16x64xf32>
    %98 = tpu.matmul %8, %97, %cst_43 {dimension_numbers = #tpu.dot_dimension_numbers<[1], [0], [0], [1], [0, 0, 1, 1], [], []>} : vector<16x32xf32>, vector<32x64xf32>, vector<16x64xf32> -> vector<16x64xf32>
    %99 = arith.addf %96, %98 : vector<16x64xf32>
    %c0_44 = arith.constant 0 : index
    %c0_45 = arith.constant 0 : index
    %100 = vector.load %arg16[%c0_44, %c0_45] : memref<32x64xf32, #tpu.memory_space<vmem>>, vector<32x64xf32>
    %cst_46 = arith.constant dense<0.000000e+00> : vector<16x64xf32>
    %101 = tpu.matmul %94, %100, %cst_46 {dimension_numbers = #tpu.dot_dimension_numbers<[1], [0], [0], [1], [0, 0, 1, 1], [], []>} : vector<16x32xf32>, vector<32x64xf32>, vector<16x64xf32> -> vector<16x64xf32>
    %102 = arith.addf %99, %101 : vector<16x64xf32>
    %103 = vector.shape_cast %102 : vector<16x64xf32> to vector<2x8x64xf32>
    %c0_47 = arith.constant 0 : index
    %c0_48 = arith.constant 0 : index
    %c0_49 = arith.constant 0 : index
    %104 = vector.load %arg7[%c0_47, %c0_48, %c0_49] : memref<2x1x64xf32, #tpu.memory_space<vmem>>, vector<2x1x64xf32>
    %105 = vector.broadcast %104 : vector<2x1x64xf32> to vector<2x8x64xf32>
    %106 = arith.addf %103, %105 : vector<2x8x64xf32>
    %cst_50 = arith.constant 0.000000e+00 : f32
    %107 = vector.broadcast %cst_50 : f32 to vector<2x8x64xf32>
    %108 = arith.subf %107, %106 : vector<2x8x64xf32>
    %109 = math.exp %108 : vector<2x8x64xf32>
    %cst_51 = arith.constant 1.000000e+00 : f32
    %110 = vector.broadcast %cst_51 : f32 to vector<2x8x64xf32>
    %111 = arith.addf %110, %109 : vector<2x8x64xf32>
    %cst_52 = arith.constant 1.000000e+00 : f32
    %112 = vector.broadcast %cst_52 : f32 to vector<2x8x64xf32>
    %113 = arith.divf %112, %111 : vector<2x8x64xf32>
    %114 = vector.extract_strided_slice %113 {offsets = [0, 0, 0], sizes = [2, 8, 32], strides = [1, 1, 1]} : vector<2x8x64xf32> to vector<2x8x32xf32>
    %115 = vector.extract_strided_slice %113 {offsets = [0, 0, 32], sizes = [2, 8, 32], strides = [1, 1, 1]} : vector<2x8x64xf32> to vector<2x8x32xf32>
    %116 = arith.mulf %115, %3 : vector<2x8x32xf32>
    %117 = vector.shape_cast %116 : vector<2x8x32xf32> to vector<16x32xf32>
    %c0_53 = arith.constant 0 : index
    %c0_54 = arith.constant 0 : index
    %118 = vector.load %arg17[%c0_53, %c0_54] : memref<32x32xf32, #tpu.memory_space<vmem>>, vector<32x32xf32>
    %cst_55 = arith.constant dense<0.000000e+00> : vector<16x32xf32>
    %119 = tpu.matmul %117, %118, %cst_55 {dimension_numbers = #tpu.dot_dimension_numbers<[1], [0], [0], [1], [0, 0, 1, 1], [], []>} : vector<16x32xf32>, vector<32x32xf32>, vector<16x32xf32> -> vector<16x32xf32>
    %c0_56 = arith.constant 0 : index
    %c0_57 = arith.constant 0 : index
    %120 = vector.load %arg18[%c0_56, %c0_57] : memref<32x32xf32, #tpu.memory_space<vmem>>, vector<32x32xf32>
    %cst_58 = arith.constant dense<0.000000e+00> : vector<16x32xf32>
    %121 = tpu.matmul %8, %120, %cst_58 {dimension_numbers = #tpu.dot_dimension_numbers<[1], [0], [0], [1], [0, 0, 1, 1], [], []>} : vector<16x32xf32>, vector<32x32xf32>, vector<16x32xf32> -> vector<16x32xf32>
    %122 = arith.addf %119, %121 : vector<16x32xf32>
    %c0_59 = arith.constant 0 : index
    %c0_60 = arith.constant 0 : index
    %123 = vector.load %arg19[%c0_59, %c0_60] : memref<32x32xf32, #tpu.memory_space<vmem>>, vector<32x32xf32>
    %cst_61 = arith.constant dense<0.000000e+00> : vector<16x32xf32>
    %124 = tpu.matmul %94, %123, %cst_61 {dimension_numbers = #tpu.dot_dimension_numbers<[1], [0], [0], [1], [0, 0, 1, 1], [], []>} : vector<16x32xf32>, vector<32x32xf32>, vector<16x32xf32> -> vector<16x32xf32>
    %125 = arith.addf %122, %124 : vector<16x32xf32>
    %126 = vector.shape_cast %125 : vector<16x32xf32> to vector<2x8x32xf32>
    %c0_62 = arith.constant 0 : index
    %c0_63 = arith.constant 0 : index
    %c0_64 = arith.constant 0 : index
    %127 = vector.load %arg8[%c0_62, %c0_63, %c0_64] : memref<2x1x32xf32, #tpu.memory_space<vmem>>, vector<2x1x32xf32>
    %128 = vector.broadcast %127 : vector<2x1x32xf32> to vector<2x8x32xf32>
    %129 = arith.addf %126, %128 : vector<2x8x32xf32>
    %130 = math.tanh %129 : vector<2x8x32xf32>
    %cst_65 = arith.constant 1.000000e+00 : f32
    %131 = vector.broadcast %cst_65 : f32 to vector<2x8x32xf32>
    %132 = arith.subf %131, %114 : vector<2x8x32xf32>
    %133 = arith.mulf %132, %3 : vector<2x8x32xf32>
    %134 = arith.mulf %114, %130 : vector<2x8x32xf32>
    %135 = arith.addf %133, %134 : vector<2x8x32xf32>
    %c0_66 = arith.constant 0 : index
    %c0_67 = arith.constant 0 : index
    %c0_68 = arith.constant 0 : index
    %136 = vector.load %arg20[%c0_66, %c0_67, %c0_68] : memref<2x8x32xf32, #tpu.memory_space<vmem>>, vector<2x8x32xf32>
    tpu.vector_store %arg20[%c0_66, %c0_67, %c0_68], %135 {strides = array<i32>} : memref<2x8x32xf32, #tpu.memory_space<vmem>>, vector<2x8x32xf32>,
    return
  }
  func.func @transform_0(%arg0: i32) -> (i32, i32, i32) {
    %c0_i32 = arith.constant 0 : i32
    %c0_i32_0 = arith.constant 0 : i32
    %c0_i32_1 = arith.constant 0 : i32
    return %arg0, %c0_i32, %c0_i32_0 : i32, i32, i32
  }
  func.func @transform_1(%arg0: i32) -> (i32, i32, i32) {
    %c0_i32 = arith.constant 0 : i32
    %c0_i32_0 = arith.constant 0 : i32
    %c0_i32_1 = arith.constant 0 : i32
    return %arg0, %c0_i32, %c0_i32_0 : i32, i32, i32
  }
  func.func @transform_2(%arg0: i32) -> (i32, i32, i32) {
    %c0_i32 = arith.constant 0 : i32
    %c0_i32_0 = arith.constant 0 : i32
    %c0_i32_1 = arith.constant 0 : i32
    return %arg0, %c0_i32, %c0_i32_0 : i32, i32, i32
  }
  func.func @transform_3(%arg0: i32) -> (i32, i32, i32) {
    %c0_i32 = arith.constant 0 : i32
    %c0_i32_0 = arith.constant 0 : i32
    %c0_i32_1 = arith.constant 0 : i32
    return %arg0, %c0_i32, %c0_i32_0 : i32, i32, i32
  }
  func.func @transform_4(%arg0: i32) -> (i32, i32) {
    %c0_i32 = arith.constant 0 : i32
    %c0_i32_0 = arith.constant 0 : i32
    %c0_i32_1 = arith.constant 0 : i32
    return %c0_i32, %c0_i32_0 : i32, i32
  }
  func.func @transform_5(%arg0: i32) -> (i32, i32, i32) {
    %c0_i32 = arith.constant 0 : i32
    %c0_i32_0 = arith.constant 0 : i32
    %c0_i32_1 = arith.constant 0 : i32
    return %arg0, %c0_i32, %c0_i32_0 : i32, i32, i32
  }
  func.func @transform_6(%arg0: i32) -> (i32, i32, i32) {
    %c0_i32 = arith.constant 0 : i32
    %c0_i32_0 = arith.constant 0 : i32
    %c0_i32_1 = arith.constant 0 : i32
    return %arg0, %c0_i32, %c0_i32_0 : i32, i32, i32
  }
  func.func @transform_7(%arg0: i32) -> (i32, i32, i32) {
    %c0_i32 = arith.constant 0 : i32
    %c0_i32_0 = arith.constant 0 : i32
    %c0_i32_1 = arith.constant 0 : i32
    return %arg0, %c0_i32, %c0_i32_0 : i32, i32, i32
  }
  func.func @transform_8(%arg0: i32) -> (i32, i32) {
    %c0_i32 = arith.constant 0 : i32
    %c0_i32_0 = arith.constant 0 : i32
    %c0_i32_1 = arith.constant 0 : i32
    return %c0_i32, %c0_i32_0 : i32, i32
  }
  func.func @transform_9(%arg0: i32) -> (i32, i32) {
    %c0_i32 = arith.constant 0 : i32
    %c0_i32_0 = arith.constant 0 : i32
    %c0_i32_1 = arith.constant 0 : i32
    return %c0_i32, %c0_i32_0 : i32, i32
  }
  func.func @transform_10(%arg0: i32) -> (i32, i32) {
    %c0_i32 = arith.constant 0 : i32
    %c0_i32_0 = arith.constant 0 : i32
    %c0_i32_1 = arith.constant 0 : i32
    return %c0_i32, %c0_i32_0 : i32, i32
  }
  func.func @transform_11(%arg0: i32) -> (i32, i32) {
    %c0_i32 = arith.constant 0 : i32
    %c0_i32_0 = arith.constant 0 : i32
    %c0_i32_1 = arith.constant 0 : i32
    return %c0_i32, %c0_i32_0 : i32, i32
  }
  func.func @transform_12(%arg0: i32) -> (i32, i32) {
    %c0_i32 = arith.constant 0 : i32
    %c0_i32_0 = arith.constant 0 : i32
    %c0_i32_1 = arith.constant 0 : i32
    return %c0_i32, %c0_i32_0 : i32, i32
  }
  func.func @transform_13(%arg0: i32) -> (i32, i32) {
    %c0_i32 = arith.constant 0 : i32
    %c0_i32_0 = arith.constant 0 : i32
    %c0_i32_1 = arith.constant 0 : i32
    return %c0_i32, %c0_i32_0 : i32, i32
  }
  func.func @transform_14(%arg0: i32) -> (i32, i32) {
    %c0_i32 = arith.constant 0 : i32
    %c0_i32_0 = arith.constant 0 : i32
    %c0_i32_1 = arith.constant 0 : i32
    return %c0_i32, %c0_i32_0 : i32, i32
  }
  func.func @transform_15(%arg0: i32) -> (i32, i32) {
    %c0_i32 = arith.constant 0 : i32
    %c0_i32_0 = arith.constant 0 : i32
    %c0_i32_1 = arith.constant 0 : i32
    return %c0_i32, %c0_i32_0 : i32, i32
  }
  func.func @transform_16(%arg0: i32) -> (i32, i32) {
    %c0_i32 = arith.constant 0 : i32
    %c0_i32_0 = arith.constant 0 : i32
    %c0_i32_1 = arith.constant 0 : i32
    return %c0_i32, %c0_i32_0 : i32, i32
  }
  func.func @transform_17(%arg0: i32) -> (i32, i32) {
    %c0_i32 = arith.constant 0 : i32
    %c0_i32_0 = arith.constant 0 : i32
    %c0_i32_1 = arith.constant 0 : i32
    return %c0_i32, %c0_i32_0 : i32, i32
  }
  func.func @transform_18(%arg0: i32) -> (i32, i32) {
    %c0_i32 = arith.constant 0 : i32
    %c0_i32_0 = arith.constant 0 : i32
    %c0_i32_1 = arith.constant 0 : i32
    return %c0_i32, %c0_i32_0 : i32, i32
  }
  func.func @transform_19(%arg0: i32) -> (i32, i32, i32) {
    %c0_i32 = arith.constant 0 : i32
    %c0_i32_0 = arith.constant 0 : i32
    %c0_i32_1 = arith.constant 0 : i32
    return %arg0, %c0_i32, %c0_i32_0 : i32, i32, i32
  }
}

</mosaic_0001>

<llo_original>
// kernel: tpu_custom_call.1
$region0: #{tpu_custom_call.1}
  #allocation0 [shape = 'u32[]', space=smem, size = 0x4, offset = 0x4, fixed_abs, tag = 'smem constant byte address 0x4 - core index']
  #allocation1 [shape = 'u32[144,128]{1,0:T(1,128)}', space=vmem, size = 0x12000, scoped, tag = 'internal scratch']
  %s0 = inlined_call_operand.vmem [shape: s32[2,8,4], index: 0, kind: input, shape index: {}]
  %s1 = inlined_call_operand.vmem [shape: f32[2,8,4], index: 1, kind: input, shape index: {}]
  %s2 = inlined_call_operand.hbm [shape: f32[2,8,32], index: 2, kind: input, shape index: {}]
  %s3 = inlined_call_operand.hbm [shape: f32[2,8,32], index: 3, kind: input, shape index: {}]
  %s4 = inlined_call_operand.hbm [shape: f32[8,32], index: 4, kind: input, shape index: {}]
  %s5 = inlined_call_operand.vmem [shape: f32[2,1,1], index: 5, kind: input, shape index: {}]
  %s6 = inlined_call_operand.hbm [shape: f32[2,1,64], index: 6, kind: input, shape index: {}]
  %s7 = inlined_call_operand.hbm [shape: f32[2,1,32], index: 7, kind: input, shape index: {}]
  %s8 = inlined_call_operand.vmem [shape: f32[1,32], index: 8, kind: input, shape index: {}]
  %s9 = inlined_call_operand.hbm [shape: f32[1,32], index: 9, kind: input, shape index: {}]
  %s10 = inlined_call_operand.hbm [shape: f32[1,32], index: 10, kind: input, shape index: {}]
  %s11 = inlined_call_operand.hbm [shape: f32[1,32], index: 11, kind: input, shape index: {}]
  %s12 = inlined_call_operand.vmem [shape: f32[32,32], index: 12, kind: input, shape index: {}]
  %s13 = inlined_call_operand.vmem [shape: f32[32,64], index: 13, kind: input, shape index: {}]
  %s14 = inlined_call_operand.vmem [shape: f32[32,64], index: 14, kind: input, shape index: {}]
  %s15 = inlined_call_operand.hbm [shape: f32[32,64], index: 15, kind: input, shape index: {}]
  %s16 = inlined_call_operand.hbm [shape: f32[32,32], index: 16, kind: input, shape index: {}]
  %s17 = inlined_call_operand.hbm [shape: f32[32,32], index: 17, kind: input, shape index: {}]
  %s18 = inlined_call_operand.hbm [shape: f32[32,32], index: 18, kind: input, shape index: {}]
  %s19 = inlined_call_operand.hbm [shape: f32[2,8,32], index: 19, kind: output, shape index: {}]
  %s20 = sld [smem:[#allocation0]]
  $region134: #{tpu_custom_call.1} parent=0
    _
  %s22 = ssub.s32 1, %s20
  %s23 = scalar_select 0, %s22, %s20
  $region1: #{tpu_custom_call.1} parent=0
    #allocation2 [shape = 'u8[8192]{0}', space=vmem, size = 0x2000, scoped, tag = 'input window, operand 2, single buffered']
    #allocation3 [shape = 's32[1]{0}', space=sflag, size = 0x4, scoped, tag = 'scoped memory for tpu_custom_call.1']
    #allocation4 [shape = 's32[1]{0}', space=sflag, size = 0x4, scoped, tag = 'scoped memory for tpu_custom_call.1']
    #allocation5 [shape = 'u8[8192]{0}', space=vmem, size = 0x2000, scoped, tag = 'input window, operand 3, single buffered']
    #allocation6 [shape = 's32[1]{0}', space=sflag, size = 0x4, scoped, tag = 'scoped memory for tpu_custom_call.1']
    #allocation7 [shape = 'u8[4096]{0}', space=vmem, size = 0x1000, scoped, tag = 'input window, operand 4, single buffered']
    #allocation8 [shape = 'u8[1024]{0}', space=vmem, size = 0x400, scoped, tag = 'input window, operand 6, single buffered']
    #allocation9 [shape = 's32[1]{0}', space=sflag, size = 0x4, scoped, tag = 'scoped memory for tpu_custom_call.1']
    #allocation10 [shape = 'u8[1024]{0}', space=vmem, size = 0x400, scoped, tag = 'input window, operand 7, single buffered']
    #allocation11 [shape = 'u8[512]{0}', space=vmem, size = 0x400, scoped, tag = 'input window, operand 9, single buffered']
    #allocation12 [shape = 's32[1]{0}', space=sflag, size = 0x4, scoped, tag = 'scoped memory for tpu_custom_call.1']
    #allocation13 [shape = 'u8[512]{0}', space=vmem, size = 0x400, scoped, tag = 'input window, operand 10, single buffered']
    #allocation14 [shape = 'u8[512]{0}', space=vmem, size = 0x400, scoped, tag = 'input window, operand 11, single buffered']
    #allocation15 [shape = 's32[1]{0}', space=sflag, size = 0x4, scoped, tag = 'scoped memory for tpu_custom_call.1']
    #allocation16 [shape = 'u8[16384]{0}', space=vmem, size = 0x4000, scoped, tag = 'input window, operand 15, single buffered']
    #allocation17 [shape = 'u8[16384]{0}', space=vmem, size = 0x4000, scoped, tag = 'input window, operand 16, single buffered']
    #allocation18 [shape = 's32[1]{0}', space=sflag, size = 0x4, scoped, tag = 'scoped memory for tpu_custom_call.1']
    #allocation19 [shape = 'u8[16384]{0}', space=vmem, size = 0x4000, scoped, tag = 'input window, operand 17, single buffered']
    #allocation20 [shape = 'u8[16384]{0}', space=vmem, size = 0x4000, scoped, tag = 'input window, operand 18, single buffered']
    #allocation21 [shape = 's32[1]{0}', space=sflag, size = 0x4, scoped, tag = 'scoped memory for tpu_custom_call.1']
    #allocation22 [shape = 'u8[8192]{0}', space=vmem, size = 0x2000, scoped, tag = 'output window, operand 0, single buffered']
    %24 = vsyncpa [#allocation3], 0
    %25 = vsyncpa [#allocation6], 0
    %26 = vsyncpa [#allocation9], 0
    %27 = vsyncpa [#allocation12], 0
    %28 = vsyncpa [#allocation15], 0
    %29 = vsyncpa [#allocation18], 0
    %30 = vsyncpa [#allocation21], 0
    %31 = vsyncpa [#allocation4], 0
    // Predicated region
    $region2: #{tpu_custom_call.1} parent=1 // pred_check
      _
    $region3: #{tpu_custom_call.1} parent=1 // pred_check_branch
      %33 = sbr.rel (0) target = $region5
    $region4: #{tpu_custom_call.1} parent=1 // pred_region
      _
    $region5: #{tpu_custom_call.1} parent=1 // pred_fallthru
      _
    // Predicated region
    $region6: #{tpu_custom_call.1} parent=1 // pred_check
      _
    $region7: #{tpu_custom_call.1} parent=1 // pred_check_branch
      %35 = sbr.rel (0) target = $region9
    $region8: #{tpu_custom_call.1} parent=1 // pred_region
      _
    $region9: #{tpu_custom_call.1} parent=1 // pred_fallthru
      _
    // Predicated region
    $region10: #{tpu_custom_call.1} parent=1 // pred_check
      _
    $region11: #{tpu_custom_call.1} parent=1 // pred_check_branch
      %37 = sbr.rel (0) target = $region13
    $region12: #{tpu_custom_call.1} parent=1 // pred_region
      %s39 = ssub.s32 256, 256
      %40 = vsyncadd [#allocation3], %s39
      %s41 = sshll.u32 [#allocation2], 4
      %s42 = int_to_ptr.vmem [resolvable:$true] %s41
      %47 = dma.hbm_to_vmem [thread:$0]  %s2, 256, %s42, [#allocation3], 128, 128, 8
    $region13: #{tpu_custom_call.1} parent=1 // pred_fallthru
      _
    // Predicated region
    $region14: #{tpu_custom_call.1} parent=1 // pred_check
      _
    $region15: #{tpu_custom_call.1} parent=1 // pred_check_branch
      %49 = sbr.rel (0) target = $region17
    $region16: #{tpu_custom_call.1} parent=1 // pred_region
      %s51 = ssub.s32 256, 256
      %52 = vsyncadd [#allocation6], %s51
      %s53 = sshll.u32 [#allocation5], 4
      %s54 = int_to_ptr.vmem [resolvable:$true] %s53
      %59 = dma.hbm_to_vmem [thread:$0]  %s3, 256, %s54, [#allocation6], 128, 128, 8
    $region17: #{tpu_custom_call.1} parent=1 // pred_fallthru
      _
    // Predicated region
    $region18: #{tpu_custom_call.1} parent=1 // pred_check
      _
    $region19: #{tpu_custom_call.1} parent=1 // pred_check_branch
      %61 = sbr.rel (0) target = $region21
    $region20: #{tpu_custom_call.1} parent=1 // pred_region
      %s63 = ssub.s32 128, 128
      %64 = vsyncadd [#allocation6], %s63
      %s66 = sshll.u32 [#allocation7], 4
      %s67 = int_to_ptr.vmem [resolvable:$true] %s66
      %69 = dma.hbm_to_vmem [thread:$0]  %s4, 128, %s67, [#allocation6]
    $region21: #{tpu_custom_call.1} parent=1 // pred_fallthru
      _
    // Predicated region
    $region22: #{tpu_custom_call.1} parent=1 // pred_check
      _
    $region23: #{tpu_custom_call.1} parent=1 // pred_check_branch
      %71 = sbr.rel (0) target = $region25
    $region24: #{tpu_custom_call.1} parent=1 // pred_region
      _
    $region25: #{tpu_custom_call.1} parent=1 // pred_fallthru
      _
    // Predicated region
    $region26: #{tpu_custom_call.1} parent=1 // pred_check
      _
    $region27: #{tpu_custom_call.1} parent=1 // pred_check_branch
      %73 = sbr.rel (0) target = $region29
    $region28: #{tpu_custom_call.1} parent=1 // pred_region
      %s75 = ssub.s32 32, 32
      %76 = vsyncadd [#allocation9], %s75
      %s77 = sshll.u32 [#allocation8], 4
      %s78 = int_to_ptr.vmem [resolvable:$true] %s77
      %83 = dma.hbm_to_vmem [thread:$0]  %s6, 32, %s78, [#allocation9], 16, 16, 1
    $region29: #{tpu_custom_call.1} parent=1 // pred_fallthru
      _
    // Predicated region
    $region30: #{tpu_custom_call.1} parent=1 // pred_check
      _
    $region31: #{tpu_custom_call.1} parent=1 // pred_check_branch
      %85 = sbr.rel (0) target = $region33
    $region32: #{tpu_custom_call.1} parent=1 // pred_region
      %s87 = ssub.s32 32, 32
      %88 = vsyncadd [#allocation9], %s87
      %s89 = sshll.u32 [#allocation10], 4
      %s90 = int_to_ptr.vmem [resolvable:$true] %s89
      %95 = dma.hbm_to_vmem [thread:$0]  %s7, 32, %s90, [#allocation9], 16, 16, 1
    $region33: #{tpu_custom_call.1} parent=1 // pred_fallthru
      _
    // Predicated region
    $region34: #{tpu_custom_call.1} parent=1 // pred_check
      _
    $region35: #{tpu_custom_call.1} parent=1 // pred_check_branch
      %97 = sbr.rel (0) target = $region37
    $region36: #{tpu_custom_call.1} parent=1 // pred_region
      _
    $region37: #{tpu_custom_call.1} parent=1 // pred_fallthru
      _
    // Predicated region
    $region38: #{tpu_custom_call.1} parent=1 // pred_check
      _
    $region39: #{tpu_custom_call.1} parent=1 // pred_check_branch
      %99 = sbr.rel (0) target = $region41
    $region40: #{tpu_custom_call.1} parent=1 // pred_region
      %s101 = ssub.s32 16, 16
      %102 = vsyncadd [#allocation12], %s101
      %s104 = sshll.u32 [#allocation11], 4
      %s105 = int_to_ptr.vmem [resolvable:$true] %s104
      %107 = dma.hbm_to_vmem [thread:$0]  %s9, 16, %s105, [#allocation12]
    $region41: #{tpu_custom_call.1} parent=1 // pred_fallthru
      _
    // Predicated region
    $region42: #{tpu_custom_call.1} parent=1 // pred_check
      _
    $region43: #{tpu_custom_call.1} parent=1 // pred_check_branch
      %109 = sbr.rel (0) target = $region45
    $region44: #{tpu_custom_call.1} parent=1 // pred_region
      %s111 = ssub.s32 16, 16
      %112 = vsyncadd [#allocation12], %s111
      %s114 = sshll.u32 [#allocation13], 4
      %s115 = int_to_ptr.vmem [resolvable:$true] %s114
      %117 = dma.hbm_to_vmem [thread:$0]  %s10, 16, %s115, [#allocation12]
    $region45: #{tpu_custom_call.1} parent=1 // pred_fallthru
      _
    // Predicated region
    $region46: #{tpu_custom_call.1} parent=1 // pred_check
      _
    $region47: #{tpu_custom_call.1} parent=1 // pred_check_branch
      %119 = sbr.rel (0) target = $region49
    $region48: #{tpu_custom_call.1} parent=1 // pred_region
      %s121 = ssub.s32 16, 16
      %122 = vsyncadd [#allocation15], %s121
      %s124 = sshll.u32 [#allocation14], 4
      %s125 = int_to_ptr.vmem [resolvable:$true] %s124
      %127 = dma.hbm_to_vmem [thread:$0]  %s11, 16, %s125, [#allocation15]
    $region49: #{tpu_custom_call.1} parent=1 // pred_fallthru
      _
    // Predicated region
    $region50: #{tpu_custom_call.1} parent=1 // pred_check
      _
    $region51: #{tpu_custom_call.1} parent=1 // pred_check_branch
      %129 = sbr.rel (0) target = $region53
    $region52: #{tpu_custom_call.1} parent=1 // pred_region
      _
    $region53: #{tpu_custom_call.1} parent=1 // pred_fallthru
      _
    // Predicated region
    $region54: #{tpu_custom_call.1} parent=1 // pred_check
      _
    $region55: #{tpu_custom_call.1} parent=1 // pred_check_branch
      %131 = sbr.rel (0) target = $region57
    $region56: #{tpu_custom_call.1} parent=1 // pred_region
      _
    $region57: #{tpu_custom_call.1} parent=1 // pred_fallthru
      _
    // Predicated region
    $region58: #{tpu_custom_call.1} parent=1 // pred_check
      _
    $region59: #{tpu_custom_call.1} parent=1 // pred_check_branch
      %133 = sbr.rel (0) target = $region61
    $region60: #{tpu_custom_call.1} parent=1 // pred_region
      _
    $region61: #{tpu_custom_call.1} parent=1 // pred_fallthru
      _
    // Predicated region
    $region62: #{tpu_custom_call.1} parent=1 // pred_check
      _
    $region63: #{tpu_custom_call.1} parent=1 // pred_check_branch
      %135 = sbr.rel (0) target = $region65
    $region64: #{tpu_custom_call.1} parent=1 // pred_region
      %s137 = ssub.s32 512, 512
      %138 = vsyncadd [#allocation15], %s137
      %s139 = sshll.u32 [#allocation16], 4
      %s140 = int_to_ptr.vmem [resolvable:$true] %s139
      %145 = dma.hbm_to_vmem [thread:$0]  %s15, 512, %s140, [#allocation15], 128, 128, 8
    $region65: #{tpu_custom_call.1} parent=1 // pred_fallthru
      _
    // Predicated region
    $region66: #{tpu_custom_call.1} parent=1 // pred_check
      _
    $region67: #{tpu_custom_call.1} parent=1 // pred_check_branch
      %147 = sbr.rel (0) target = $region69
    $region68: #{tpu_custom_call.1} parent=1 // pred_region
      %s149 = ssub.s32 512, 512
      %150 = vsyncadd [#allocation18], %s149
      %s151 = sshll.u32 [#allocation17], 4
      %s152 = int_to_ptr.vmem [resolvable:$true] %s151
      %157 = dma.hbm_to_vmem [thread:$0]  %s16, 512, %s152, [#allocation18], 128, 128, 8
    $region69: #{tpu_custom_call.1} parent=1 // pred_fallthru
      _
    // Predicated region
    $region70: #{tpu_custom_call.1} parent=1 // pred_check
      _
    $region71: #{tpu_custom_call.1} parent=1 // pred_check_branch
      %159 = sbr.rel (0) target = $region73
    $region72: #{tpu_custom_call.1} parent=1 // pred_region
      %s161 = ssub.s32 512, 512
      %162 = vsyncadd [#allocation18], %s161
      %s163 = sshll.u32 [#allocation19], 4
      %s164 = int_to_ptr.vmem [resolvable:$true] %s163
      %169 = dma.hbm_to_vmem [thread:$0]  %s17, 512, %s164, [#allocation18], 128, 128, 8
    $region73: #{tpu_custom_call.1} parent=1 // pred_fallthru
      _
    // Predicated region
    $region74: #{tpu_custom_call.1} parent=1 // pred_check
      _
    $region75: #{tpu_custom_call.1} parent=1 // pred_check_branch
      %171 = sbr.rel (0) target = $region77
    $region76: #{tpu_custom_call.1} parent=1 // pred_region
      %s173 = ssub.s32 512, 512
      %174 = vsyncadd [#allocation21], %s173
      %s175 = sshll.u32 [#allocation20], 4
      %s176 = int_to_ptr.vmem [resolvable:$true] %s175
      %181 = dma.hbm_to_vmem [thread:$0]  %s18, 512, %s176, [#allocation21], 128, 128, 8
    $region77: #{tpu_custom_call.1} parent=1 // pred_fallthru
      _
    // Predicated region
    $region78: #{tpu_custom_call.1} parent=1 // pred_check
      _
    $region79: #{tpu_custom_call.1} parent=1 // pred_check_branch
      %183 = sbr.rel (0) target = $region81
    $region80: #{tpu_custom_call.1} parent=1 // pred_region
      %184 = dma.done [#allocation3], 256
    $region81: #{tpu_custom_call.1} parent=1 // pred_fallthru
      _
    // Predicated region
    $region82: #{tpu_custom_call.1} parent=1 // pred_check
      _
    $region83: #{tpu_custom_call.1} parent=1 // pred_check_branch
      %186 = sbr.rel (0) target = $region85
    $region84: #{tpu_custom_call.1} parent=1 // pred_region
      %187 = dma.done [#allocation6], 256
    $region85: #{tpu_custom_call.1} parent=1 // pred_fallthru
      _
    // Predicated region
    $region86: #{tpu_custom_call.1} parent=1 // pred_check
      _
    $region87: #{tpu_custom_call.1} parent=1 // pred_check_branch
      %189 = sbr.rel (0) target = $region89
    $region88: #{tpu_custom_call.1} parent=1 // pred_region
      %190 = dma.done [#allocation6], 128
    $region89: #{tpu_custom_call.1} parent=1 // pred_fallthru
      _
    // Predicated region
    $region90: #{tpu_custom_call.1} parent=1 // pred_check
      _
    $region91: #{tpu_custom_call.1} parent=1 // pred_check_branch
      %192 = sbr.rel (0) target = $region93
    $region92: #{tpu_custom_call.1} parent=1 // pred_region
      %193 = dma.done [#allocation9], 32
    $region93: #{tpu_custom_call.1} parent=1 // pred_fallthru
      _
    // Predicated region
    $region94: #{tpu_custom_call.1} parent=1 // pred_check
      _
    $region95: #{tpu_custom_call.1} parent=1 // pred_check_branch
      %195 = sbr.rel (0) target = $region97
    $region96: #{tpu_custom_call.1} parent=1 // pred_region
      %196 = dma.done [#allocation9], 32
    $region97: #{tpu_custom_call.1} parent=1 // pred_fallthru
      _
    // Predicated region
    $region98: #{tpu_custom_call.1} parent=1 // pred_check
      _
    $region99: #{tpu_custom_call.1} parent=1 // pred_check_branch
      %198 = sbr.rel (0) target = $region101
    $region100: #{tpu_custom_call.1} parent=1 // pred_region
      %199 = dma.done [#allocation12], 16
    $region101: #{tpu_custom_call.1} parent=1 // pred_fallthru
      _
    // Predicated region
    $region102: #{tpu_custom_call.1} parent=1 // pred_check
      _
    $region103: #{tpu_custom_call.1} parent=1 // pred_check_branch
      %201 = sbr.rel (0) target = $region105
    $region104: #{tpu_custom_call.1} parent=1 // pred_region
      %202 = dma.done [#allocation12], 16
    $region105: #{tpu_custom_call.1} parent=1 // pred_fallthru
      _
    // Predicated region
    $region106: #{tpu_custom_call.1} parent=1 // pred_check
      _
    $region107: #{tpu_custom_call.1} parent=1 // pred_check_branch
      %204 = sbr.rel (0) target = $region109
    $region108: #{tpu_custom_call.1} parent=1 // pred_region
      %205 = dma.done [#allocation15], 16
    $region109: #{tpu_custom_call.1} parent=1 // pred_fallthru
      _
    // Predicated region
    $region110: #{tpu_custom_call.1} parent=1 // pred_check
      _
    $region111: #{tpu_custom_call.1} parent=1 // pred_check_branch
      %207 = sbr.rel (0) target = $region113
    $region112: #{tpu_custom_call.1} parent=1 // pred_region
      %208 = dma.done [#allocation15], 512
    $region113: #{tpu_custom_call.1} parent=1 // pred_fallthru
      _
    // Predicated region
    $region114: #{tpu_custom_call.1} parent=1 // pred_check
      _
    $region115: #{tpu_custom_call.1} parent=1 // pred_check_branch
      %210 = sbr.rel (0) target = $region117
    $region116: #{tpu_custom_call.1} parent=1 // pred_region
      %211 = dma.done [#allocation18], 512
    $region117: #{tpu_custom_call.1} parent=1 // pred_fallthru
      _
    // Predicated region
    $region118: #{tpu_custom_call.1} parent=1 // pred_check
      _
    $region119: #{tpu_custom_call.1} parent=1 // pred_check_branch
      %213 = sbr.rel (0) target = $region121
    $region120: #{tpu_custom_call.1} parent=1 // pred_region
      %214 = dma.done [#allocation18], 512
    $region121: #{tpu_custom_call.1} parent=1 // pred_fallthru
      _
    // Predicated region
    $region122: #{tpu_custom_call.1} parent=1 // pred_check
      _
    $region123: #{tpu_custom_call.1} parent=1 // pred_check_branch
      %216 = sbr.rel (0) target = $region125
    $region124: #{tpu_custom_call.1} parent=1 // pred_region
      %217 = dma.done [#allocation21], 512
    $region125: #{tpu_custom_call.1} parent=1 // pred_fallthru
      _
    %v218 = vld [vmem:[%s0] sm:$0xff]
    %v219 = vld [vmem:[%s0 + $0x8] sm:$0xff]
    %v220 = vld [vmem:[%s1] sm:$0xff]
    %v221 = vld [vmem:[%s1 + $0x8] sm:$0xff]
    %v222 = vld [vmem:[#allocation2] sm:$0xff]
    %v223 = vld [vmem:[#allocation2 + $0x8] sm:$0xff]
    %v224 = vld [vmem:[#allocation5] sm:$0xff]
    %v225 = vld [vmem:[#allocation5 + $0x8] sm:$0xff]
    %v226 = vld [vmem:[#allocation7] sm:$0xff]
    %v227 = vadd.f32 %v224, %v226
    %v228 = vadd.f32 %v225, %v226
    %v229 = vld [vmem:[#allocation14] sm:$0x1]
    %v230 = vld [vmem:[%s12] sm:$0xff]
    %v231 = vld [vmem:[%s12 + $0x8] sm:$0xff]
    %v232 = vld [vmem:[%s12 + $0x10] sm:$0xff]
    %v233 = vld [vmem:[%s12 + $0x18] sm:$0xff]
    %vm234 = vcmask 261120
    %v236 = vsel %vm234, %v227, 0
    %v239 = vsel %vm234, %v228, 0
    %241 = vmatprep.subr.mxu0 0.0
    %242 = vmatpush1.msra.mxu0 %v230
    %243 = vmatprep.subr.mxu0 0.0
    %244 = vmatpush1.msra.mxu0 %v231
    %245 = vmatprep.subr.mxu0 0.0
    %246 = vmatpush1.msra.mxu0 %v232
    %247 = vmatprep.subr.mxu0 0.0
    %248 = vmatpush1.msra.mxu0 %v233
    %249 = vmatprep.subr.mxu0 0.0
    %250 = vmatpush1.msra.mxu0 0.0
    %251 = vmatprep.subr.mxu0 0.0
    %252 = vmatpush1.msra.mxu0 0.0
    %253 = vmatprep.subr.mxu0 0.0
    %254 = vmatpush1.msra.mxu0 0.0
    %255 = vmatprep.subr.mxu0 0.0
    %256 = vmatpush1.msra.mxu0 0.0
    %257 = vmatprep.subr.mxu0 0.0
    %258 = vmatpush1.msra.mxu0 0.0
    %259 = vmatprep.subr.mxu0 0.0
    %260 = vmatpush1.msra.mxu0 0.0
    %261 = vmatprep.subr.mxu0 0.0
    %262 = vmatpush1.msra.mxu0 0.0
    %263 = vmatprep.subr.mxu0 0.0
    %264 = vmatpush1.msra.mxu0 0.0
    %265 = vmatprep.subr.mxu0 0.0
    %266 = vmatpush1.msra.mxu0 0.0
    %267 = vmatprep.subr.mxu0 0.0
    %268 = vmatpush1.msra.mxu0 0.0
    %269 = vmatprep.subr.mxu0 0.0
    %270 = vmatpush1.msra.mxu0 0.0
    %271 = vmatprep.subr.mxu0 0.0
    %272 = vmatpush1.msra.mxu0 0.0
    %273 = vmatprep.subr.mxu0 0.0
    %274 = vmatpush1.msra.mxu0 0.0
    %275 = vmatprep.subr.mxu0 0.0
    %276 = vmatpush1.msra.mxu0 0.0
    %277 = vmatprep.subr.mxu0 0.0
    %278 = vmatpush1.msra.mxu0 0.0
    %279 = vmatprep.subr.mxu0 0.0
    %280 = vmatpush1.msra.mxu0 0.0
    %281 = vmatprep.subr.mxu0 0.0
    %282 = vmatpush1.msra.mxu0 0.0
    %283 = vmatprep.subr.mxu0 0.0
    %284 = vmatpush1.msra.mxu0 0.0
    %285 = vmatprep.subr.mxu0 0.0
    %286 = vmatpush1.msra.mxu0 0.0
    %287 = vmatprep.subr.mxu0 0.0
    %288 = vmatpush1.msra.mxu0 0.0
    %289 = vmatprep.subr.mxu0 0.0
    %290 = vmatpush1.msra.mxu0 0.0
    %291 = vmatprep.subr.mxu0 0.0
    %292 = vmatpush1.msra.mxu0 0.0
    %293 = vmatprep.subr.mxu0 0.0
    %294 = vmatpush1.msra.mxu0 0.0
    %295 = vmatprep.subr.mxu0 0.0
    %296 = vmatpush1.msra.mxu0 0.0
    %297 = vmatprep.subr.mxu0 0.0
    %298 = vmatpush1.msra.mxu0 0.0
    %299 = vmatprep.subr.mxu0 0.0
    %300 = vmatpush1.msra.mxu0 0.0
    %301 = vmatprep.subr.mxu0 0.0
    %302 = vmatpush1.msra.mxu0 0.0
    %303 = vmatprep.subr.mxu0 0.0
    %304 = vmatpush1.msra.mxu0 0.0
    %305 = vmatprep.mubr.f32.mxu0 0.0
    %306 = vmatmul.mubr.f32.gmra.mrb[0].mxu0 %v236
    %v307 = vpop.f32.mrb[0].mxu0
    %v308 = vadd.f32 0.0, %v307
    %v309 = vpop.f32.mrb[0].mxu0
    %310 = vmatprep.mubr.f32.mxu0 0.0
    %311 = vmatmul.mubr.f32.gmra.mrb[0].mxu0 %v239
    %v312 = vpop.f32.mrb[0].mxu0
    %v313 = vadd.f32 0.0, %v312
    %v314 = vpop.f32.mrb[0].mxu0
    %315 = vdwg.mxu0
    %v316 = vld [vmem:[%s8] sm:$0x1]
    %v317 = vld [vmem:[#allocation11] sm:$0x1]
    %v319 = vlaneseq
    %v320 = vshrl.u32 %v319, 7
    %v321 = vsub.s32 0, %v320
    %v322 = vrot.slane %v317, %v321
    %v324 = vmul.f32 %v227, %v322
    %v325 = vmul.f32 %v228, %v322
    %v326 = vsel %vm234, %v324, 0.0
    %327 = vadd.xlane.f32.xlu0 %v326
    %v328 = vpop.xlane.xlu0 %327
    %v329 = vsel %vm234, %v325, 0.0
    %330 = vadd.xlane.f32.xlu0 %v329
    %v331 = vpop.xlane.xlu0 %330
    %v332 = vld [vmem:[#allocation13] sm:$0x1]
    %v334 = vlaneseq
    %v335 = vshrl.u32 %v334, 7
    %v336 = vsub.s32 0, %v335
    %v337 = vrot.slane %v332, %v336
    %v339 = vmul.f32 %v222, %v337
    %v340 = vmul.f32 %v223, %v337
    %v341 = vsel %vm234, %v339, 0.0
    %342 = vadd.xlane.f32.xlu0 %v341
    %v343 = vpop.xlane.xlu0 %342
    %v344 = vsel %vm234, %v340, 0.0
    %345 = vadd.xlane.f32.xlu0 %v344
    %v346 = vpop.xlane.xlu0 %345
    %v347 = vadd.f32 %v328, %v343
    %v348 = vadd.f32 %v331, %v346
    %v349 = vld [vmem:[%s5] sm:$0x1]
    %v350 = vld [vmem:[%s5 + $0x1] sm:$0x1]
    %352 = vset.pattern.permute.xlu0 0
    %353 = vperm.xlu0 %352, %v349
    %v354 = vpop.permute.xlu0 %353
    %v356 = vlaneseq
    %v357 = vshrl.u32 %v356, 7
    %v358 = vsub.s32 0, %v357
    %v359 = vrot.slane %v354, %v358
    %361 = vset.pattern.permute.xlu0 0
    %362 = vperm.xlu0 %361, %v350
    %v363 = vpop.permute.xlu0 %362
    %v365 = vlaneseq
    %v366 = vshrl.u32 %v365, 7
    %v367 = vsub.s32 0, %v366
    %v368 = vrot.slane %v363, %v367
    %v371 = vcombine.low %v359, %v368
    %v373 = vunpack.c.l.s4 1966171168
    %v374 = vunpack.c.0.s8 %v373
    %v375 = vlaneseq
    %v376 = vshrl.u32 %v375, 7
    %v377 = vsub.s32 %v374, %v376
    %v378 = vrot.slane %v371, %v377
    %v380 = vunpack.c.l.s4 1966171168
    %v381 = vunpack.c.0.s8 %v380
    %v382 = vlaneseq
    %v383 = vshrl.u32 %v382, 7
    %v384 = vsub.s32 %v381, %v383
    %v385 = vrot.slane %v378, %v384
    %v386 = vlaneseq
    %v387 = vshrl.u32 %v386, 7
    %v388 = vsub.s32 0, %v387
    %v389 = vrot.slane %v385, %v388
    %391 = vbcast.lane.b32.xlu0 %v389, 256
    %v392 = vpop.permute.xlu0 %391
    %v393 = vlaneseq
    %v394 = vshrl.u32 %v393, 7
    %v395 = vsub.s32 1, %v394
    %v396 = vrot.slane %v385, %v395
    %398 = vbcast.lane.b32.xlu0 %v396, 256
    %v399 = vpop.permute.xlu0 %398
    %v402 = vadd.f32 %v347, %v392
    %v403 = vadd.f32 %v348, %v399
    %v405 = vlaneseq
    %v406 = vshrl.u32 %v405, 7
    %v407 = vsub.s32 0, %v406
    %v408 = vrot.slane %v229, %v407
    %v410 = vmul.f32 %v308, %v408
    %v411 = vmul.f32 %v313, %v408
    %v412 = vsel %vm234, %v410, 0.0
    %413 = vadd.xlane.f32.xlu0 %v412
    %v414 = vpop.xlane.xlu0 %413
    %v415 = vsel %vm234, %v411, 0.0
    %416 = vadd.xlane.f32.xlu0 %v415
    %v417 = vpop.xlane.xlu0 %416
    %v418 = vmul.f32 %v316, %v229
    %vm419 = vcmask 253952
    %v420 = vsel %vm419, %v418, 0.0
    %421 = vadd.xlane.f32.xlu0 %v420
    %v422 = vpop.xlane.xlu0 %421
    %v423 = vrot.slane %v422, 4
    %v424 = vadd.f32 %v422, %v423
    %v425 = vrot.slane %v424, 2
    %v426 = vadd.f32 %v424, %v425
    %v427 = vrot.slane %v426, 1
    %v428 = vadd.f32 %v426, %v427
    %s429 = vtos %v428
    %vm430 = vcmp.eq.s32.totalorder %v218, 0
    %vm431 = vcmp.eq.s32.totalorder %v219, 0
    %v432 = vsel %vm430, 1, 0
    %v433 = vsel %vm431, 1, 0
    %v434 = vcvt.s32.f32 %v432
    %v435 = vcvt.s32.f32 %v433
    %v436 = vlaneseq
    %v437 = vand.u32 %v436, 127
    %v438 = vadd.s32 %v437, 1
    %v439 = vlaneseq
    %v440 = vshrl.u32 %v439, 7
    %v441 = vsub.s32 0, %v440
    %v442 = vrot.slane %v218, %v441
    %444 = vbcast.lane.b32.xlu0 %v442, 256
    %v445 = vpop.permute.xlu0 %444
    %v446 = vlaneseq
    %v447 = vshrl.u32 %v446, 7
    %v448 = vsub.s32 1, %v447
    %v449 = vrot.slane %v218, %v448
    %451 = vbcast.lane.b32.xlu0 %v449, 256
    %v452 = vpop.permute.xlu0 %451
    %v453 = vlaneseq
    %v454 = vshrl.u32 %v453, 7
    %v455 = vsub.s32 2, %v454
    %v456 = vrot.slane %v218, %v455
    %458 = vbcast.lane.b32.xlu0 %v456, 256
    %v459 = vpop.permute.xlu0 %458
    %v460 = vlaneseq
    %v461 = vshrl.u32 %v460, 7
    %v462 = vsub.s32 3, %v461
    %v463 = vrot.slane %v218, %v462
    %465 = vbcast.lane.b32.xlu0 %v463, 256
    %v466 = vpop.permute.xlu0 %465
    %v467 = vlaneseq
    %v468 = vshrl.u32 %v467, 7
    %v469 = vsub.s32 4, %v468
    %v470 = vrot.slane %v218, %v469
    %472 = vbcast.lane.b32.xlu0 %v470, 256
    %v473 = vpop.permute.xlu0 %472
    %v474 = vlaneseq
    %v475 = vshrl.u32 %v474, 7
    %v476 = vsub.s32 5, %v475
    %v477 = vrot.slane %v218, %v476
    %479 = vbcast.lane.b32.xlu0 %v477, 256
    %v480 = vpop.permute.xlu0 %479
    %v481 = vlaneseq
    %v482 = vshrl.u32 %v481, 7
    %v483 = vsub.s32 6, %v482
    %v484 = vrot.slane %v218, %v483
    %486 = vbcast.lane.b32.xlu0 %v484, 256
    %v487 = vpop.permute.xlu0 %486
    %v488 = vlaneseq
    %v489 = vshrl.u32 %v488, 7
    %v490 = vsub.s32 7, %v489
    %v491 = vrot.slane %v218, %v490
    %493 = vbcast.lane.b32.xlu0 %v491, 256
    %v494 = vpop.permute.xlu0 %493
    %v495 = vlaneseq
    %v496 = vshrl.u32 %v495, 7
    %v497 = vsub.s32 0, %v496
    %v498 = vrot.slane %v219, %v497
    %500 = vbcast.lane.b32.xlu0 %v498, 256
    %v501 = vpop.permute.xlu0 %500
    %v502 = vlaneseq
    %v503 = vshrl.u32 %v502, 7
    %v504 = vsub.s32 1, %v503
    %v505 = vrot.slane %v219, %v504
    %507 = vbcast.lane.b32.xlu0 %v505, 256
    %v508 = vpop.permute.xlu0 %507
    %v509 = vlaneseq
    %v510 = vshrl.u32 %v509, 7
    %v511 = vsub.s32 2, %v510
    %v512 = vrot.slane %v219, %v511
    %514 = vbcast.lane.b32.xlu0 %v512, 256
    %v515 = vpop.permute.xlu0 %514
    %v516 = vlaneseq
    %v517 = vshrl.u32 %v516, 7
    %v518 = vsub.s32 3, %v517
    %v519 = vrot.slane %v219, %v518
    %521 = vbcast.lane.b32.xlu0 %v519, 256
    %v522 = vpop.permute.xlu0 %521
    %v523 = vlaneseq
    %v524 = vshrl.u32 %v523, 7
    %v525 = vsub.s32 4, %v524
    %v526 = vrot.slane %v219, %v525
    %528 = vbcast.lane.b32.xlu0 %v526, 256
    %v529 = vpop.permute.xlu0 %528
    %v530 = vlaneseq
    %v531 = vshrl.u32 %v530, 7
    %v532 = vsub.s32 5, %v531
    %v533 = vrot.slane %v219, %v532
    %535 = vbcast.lane.b32.xlu0 %v533, 256
    %v536 = vpop.permute.xlu0 %535
    %v537 = vlaneseq
    %v538 = vshrl.u32 %v537, 7
    %v539 = vsub.s32 6, %v538
    %v540 = vrot.slane %v219, %v539
    %542 = vbcast.lane.b32.xlu0 %v540, 256
    %v543 = vpop.permute.xlu0 %542
    %v544 = vlaneseq
    %v545 = vshrl.u32 %v544, 7
    %v546 = vsub.s32 7, %v545
    %v547 = vrot.slane %v219, %v546
    %549 = vbcast.lane.b32.xlu0 %v547, 256
    %v550 = vpop.permute.xlu0 %549
    %vm551 = vcmp.eq.s32.totalorder %v445, %v438
    %vm552 = vcmp.eq.s32.totalorder %v452, %v438
    %vm553 = vcmp.eq.s32.totalorder %v459, %v438
    %vm554 = vcmp.eq.s32.totalorder %v466, %v438
    %vm555 = vcmp.eq.s32.totalorder %v473, %v438
    %vm556 = vcmp.eq.s32.totalorder %v480, %v438
    %vm557 = vcmp.eq.s32.totalorder %v487, %v438
    %vm558 = vcmp.eq.s32.totalorder %v494, %v438
    %vm559 = vcmp.eq.s32.totalorder %v501, %v438
    %vm560 = vcmp.eq.s32.totalorder %v508, %v438
    %vm561 = vcmp.eq.s32.totalorder %v515, %v438
    %vm562 = vcmp.eq.s32.totalorder %v522, %v438
    %vm563 = vcmp.eq.s32.totalorder %v529, %v438
    %vm564 = vcmp.eq.s32.totalorder %v536, %v438
    %vm565 = vcmp.eq.s32.totalorder %v543, %v438
    %vm566 = vcmp.eq.s32.totalorder %v550, %v438
    %v567 = vsel %vm551, 1, 0
    %v568 = vsel %vm552, 1, 0
    %v569 = vsel %vm553, 1, 0
    %v570 = vsel %vm554, 1, 0
    %v571 = vsel %vm555, 1, 0
    %v572 = vsel %vm556, 1, 0
    %v573 = vsel %vm557, 1, 0
    %v574 = vsel %vm558, 1, 0
    %v575 = vsel %vm559, 1, 0
    %v576 = vsel %vm560, 1, 0
    %v577 = vsel %vm561, 1, 0
    %v578 = vsel %vm562, 1, 0
    %v579 = vsel %vm563, 1, 0
    %v580 = vsel %vm564, 1, 0
    %v581 = vsel %vm565, 1, 0
    %v582 = vsel %vm566, 1, 0
    %v583 = vcvt.s32.f32 %v567
    %v584 = vcvt.s32.f32 %v568
    %v585 = vcvt.s32.f32 %v569
    %v586 = vcvt.s32.f32 %v570
    %v587 = vcvt.s32.f32 %v571
    %v588 = vcvt.s32.f32 %v572
    %v589 = vcvt.s32.f32 %v573
    %v590 = vcvt.s32.f32 %v574
    %v591 = vcvt.s32.f32 %v575
    %v592 = vcvt.s32.f32 %v576
    %v593 = vcvt.s32.f32 %v577
    %v594 = vcvt.s32.f32 %v578
    %v595 = vcvt.s32.f32 %v579
    %v596 = vcvt.s32.f32 %v580
    %v597 = vcvt.s32.f32 %v581
    %v598 = vcvt.s32.f32 %v582
    %v599 = vlaneseq
    %v600 = vshrl.u32 %v599, 7
    %v601 = vsub.s32 0, %v600
    %v602 = vrot.slane %v220, %v601
    %604 = vbcast.lane.b32.xlu0 %v602, 256
    %v605 = vpop.permute.xlu0 %604
    %v606 = vlaneseq
    %v607 = vshrl.u32 %v606, 7
    %v608 = vsub.s32 1, %v607
    %v609 = vrot.slane %v220, %v608
    %611 = vbcast.lane.b32.xlu0 %v609, 256
    %v612 = vpop.permute.xlu0 %611
    %v613 = vlaneseq
    %v614 = vshrl.u32 %v613, 7
    %v615 = vsub.s32 2, %v614
    %v616 = vrot.slane %v220, %v615
    %618 = vbcast.lane.b32.xlu0 %v616, 256
    %v619 = vpop.permute.xlu0 %618
    %v620 = vlaneseq
    %v621 = vshrl.u32 %v620, 7
    %v622 = vsub.s32 3, %v621
    %v623 = vrot.slane %v220, %v622
    %625 = vbcast.lane.b32.xlu0 %v623, 256
    %v626 = vpop.permute.xlu0 %625
    %v627 = vlaneseq
    %v628 = vshrl.u32 %v627, 7
    %v629 = vsub.s32 4, %v628
    %v630 = vrot.slane %v220, %v629
    %632 = vbcast.lane.b32.xlu0 %v630, 256
    %v633 = vpop.permute.xlu0 %632
    %v634 = vlaneseq
    %v635 = vshrl.u32 %v634, 7
    %v636 = vsub.s32 5, %v635
    %v637 = vrot.slane %v220, %v636
    %639 = vbcast.lane.b32.xlu0 %v637, 256
    %v640 = vpop.permute.xlu0 %639
    %v641 = vlaneseq
    %v642 = vshrl.u32 %v641, 7
    %v643 = vsub.s32 6, %v642
    %v644 = vrot.slane %v220, %v643
    %646 = vbcast.lane.b32.xlu0 %v644, 256
    %v647 = vpop.permute.xlu0 %646
    %v648 = vlaneseq
    %v649 = vshrl.u32 %v648, 7
    %v650 = vsub.s32 7, %v649
    %v651 = vrot.slane %v220, %v650
    %653 = vbcast.lane.b32.xlu0 %v651, 256
    %v654 = vpop.permute.xlu0 %653
    %v655 = vlaneseq
    %v656 = vshrl.u32 %v655, 7
    %v657 = vsub.s32 0, %v656
    %v658 = vrot.slane %v221, %v657
    %660 = vbcast.lane.b32.xlu0 %v658, 256
    %v661 = vpop.permute.xlu0 %660
    %v662 = vlaneseq
    %v663 = vshrl.u32 %v662, 7
    %v664 = vsub.s32 1, %v663
    %v665 = vrot.slane %v221, %v664
    %667 = vbcast.lane.b32.xlu0 %v665, 256
    %v668 = vpop.permute.xlu0 %667
    %v669 = vlaneseq
    %v670 = vshrl.u32 %v669, 7
    %v671 = vsub.s32 2, %v670
    %v672 = vrot.slane %v221, %v671
    %674 = vbcast.lane.b32.xlu0 %v672, 256
    %v675 = vpop.permute.xlu0 %674
    %v676 = vlaneseq
    %v677 = vshrl.u32 %v676, 7
    %v678 = vsub.s32 3, %v677
    %v679 = vrot.slane %v221, %v678
    %681 = vbcast.lane.b32.xlu0 %v679, 256
    %v682 = vpop.permute.xlu0 %681
    %v683 = vlaneseq
    %v684 = vshrl.u32 %v683, 7
    %v685 = vsub.s32 4, %v684
    %v686 = vrot.slane %v221, %v685
    %688 = vbcast.lane.b32.xlu0 %v686, 256
    %v689 = vpop.permute.xlu0 %688
    %v690 = vlaneseq
    %v691 = vshrl.u32 %v690, 7
    %v692 = vsub.s32 5, %v691
    %v693 = vrot.slane %v221, %v692
    %695 = vbcast.lane.b32.xlu0 %v693, 256
    %v696 = vpop.permute.xlu0 %695
    %v697 = vlaneseq
    %v698 = vshrl.u32 %v697, 7
    %v699 = vsub.s32 6, %v698
    %v700 = vrot.slane %v221, %v699
    %702 = vbcast.lane.b32.xlu0 %v700, 256
    %v703 = vpop.permute.xlu0 %702
    %v704 = vlaneseq
    %v705 = vshrl.u32 %v704, 7
    %v706 = vsub.s32 7, %v705
    %v707 = vrot.slane %v221, %v706
    %709 = vbcast.lane.b32.xlu0 %v707, 256
    %v710 = vpop.permute.xlu0 %709
    %v711 = vmul.f32 %v583, %v605
    %v712 = vmul.f32 %v584, %v612
    %v713 = vmul.f32 %v585, %v619
    %v714 = vmul.f32 %v586, %v626
    %v715 = vmul.f32 %v587, %v633
    %v716 = vmul.f32 %v588, %v640
    %v717 = vmul.f32 %v589, %v647
    %v718 = vmul.f32 %v590, %v654
    %v719 = vmul.f32 %v591, %v661
    %v720 = vmul.f32 %v592, %v668
    %v721 = vmul.f32 %v593, %v675
    %v722 = vmul.f32 %v594, %v682
    %v723 = vmul.f32 %v595, %v689
    %v724 = vmul.f32 %v596, %v696
    %v725 = vmul.f32 %v597, %v703
    %v726 = vmul.f32 %v598, %v710
    %v729 = vlaneseq
    %v730 = vshrl.u32 %v729, 7
    %v731 = vsub.s32 %v437, %v730
    %v732 = vrot.slane %v414, %v731
    %v733 = vlaneseq
    %v734 = vshrl.u32 %v733, 7
    %v735 = vsub.s32 %v437, %v734
    %v736 = vrot.slane %v417, %v735
    %vm737 = vcmask 1041409
    %vm738 = vcmask 1042434
    %v739 = vsel %vm738, %v732, %v732
    %vm740 = vcmask 1043459
    %v741 = vsel %vm740, %v732, %v739
    %v742 = vsel %vm738, %v736, %v736
    %v743 = vsel %vm740, %v736, %v742
    %v746 = vmul.f32 %v711, %v741
    %v747 = vmul.f32 %v712, %v741
    %v748 = vmul.f32 %v713, %v741
    %v749 = vmul.f32 %v714, %v741
    %v750 = vmul.f32 %v715, %v741
    %v751 = vmul.f32 %v716, %v741
    %v752 = vmul.f32 %v717, %v741
    %v753 = vmul.f32 %v718, %v741
    %v754 = vmul.f32 %v719, %v743
    %v755 = vmul.f32 %v720, %v743
    %v756 = vmul.f32 %v721, %v743
    %v757 = vmul.f32 %v722, %v743
    %v758 = vmul.f32 %v723, %v743
    %v759 = vmul.f32 %v724, %v743
    %v760 = vmul.f32 %v725, %v743
    %v761 = vmul.f32 %v726, %v743
    %vm762 = vcmask 60416
    %v763 = vsel %vm762, %v746, 0.0
    %764 = vadd.xlane.f32.xlu0 %v763
    %v765 = vpop.xlane.xlu0 %764
    %v766 = vsel %vm762, %v747, 0.0
    %767 = vadd.xlane.f32.xlu0 %v766
    %v768 = vpop.xlane.xlu0 %767
    %v769 = vsel %vm762, %v748, 0.0
    %770 = vadd.xlane.f32.xlu0 %v769
    %v771 = vpop.xlane.xlu0 %770
    %v772 = vsel %vm762, %v749, 0.0
    %773 = vadd.xlane.f32.xlu0 %v772
    %v774 = vpop.xlane.xlu0 %773
    %v775 = vsel %vm762, %v750, 0.0
    %776 = vadd.xlane.f32.xlu0 %v775
    %v777 = vpop.xlane.xlu0 %776
    %v778 = vsel %vm762, %v751, 0.0
    %779 = vadd.xlane.f32.xlu0 %v778
    %v780 = vpop.xlane.xlu0 %779
    %v781 = vsel %vm762, %v752, 0.0
    %782 = vadd.xlane.f32.xlu0 %v781
    %v783 = vpop.xlane.xlu0 %782
    %v784 = vsel %vm762, %v753, 0.0
    %785 = vadd.xlane.f32.xlu0 %v784
    %v786 = vpop.xlane.xlu0 %785
    %v787 = vsel %vm762, %v754, 0.0
    %788 = vadd.xlane.f32.xlu0 %v787
    %v789 = vpop.xlane.xlu0 %788
    %v790 = vsel %vm762, %v755, 0.0
    %791 = vadd.xlane.f32.xlu0 %v790
    %v792 = vpop.xlane.xlu0 %791
    %v793 = vsel %vm762, %v756, 0.0
    %794 = vadd.xlane.f32.xlu0 %v793
    %v795 = vpop.xlane.xlu0 %794
    %v796 = vsel %vm762, %v757, 0.0
    %797 = vadd.xlane.f32.xlu0 %v796
    %v798 = vpop.xlane.xlu0 %797
    %v799 = vsel %vm762, %v758, 0.0
    %800 = vadd.xlane.f32.xlu0 %v799
    %v801 = vpop.xlane.xlu0 %800
    %v802 = vsel %vm762, %v759, 0.0
    %803 = vadd.xlane.f32.xlu0 %v802
    %v804 = vpop.xlane.xlu0 %803
    %v805 = vsel %vm762, %v760, 0.0
    %806 = vadd.xlane.f32.xlu0 %v805
    %v807 = vpop.xlane.xlu0 %806
    %v808 = vsel %vm762, %v761, 0.0
    %809 = vadd.xlane.f32.xlu0 %v808
    %v810 = vpop.xlane.xlu0 %809
    %v811 = vmul.f32 %v434, %v220
    %v812 = vmul.f32 %v435, %v221
    %v813 = vstv %s429
    %v814 = vmul.f32 %v811, %v813
    %v815 = vmul.f32 %v812, %v813
    %v818 = vlaneseq
    %v819 = vshrl.u32 %v818, 7
    %v820 = vsub.s32 0, %v819
    %v821 = vrot.slane %v814, %v820
    %823 = vbcast.lane.b32.xlu0 %v821, 256
    %v824 = vpop.permute.xlu0 %823
    %v825 = vlaneseq
    %v826 = vshrl.u32 %v825, 7
    %v827 = vsub.s32 1, %v826
    %v828 = vrot.slane %v814, %v827
    %830 = vbcast.lane.b32.xlu0 %v828, 256
    %v831 = vpop.permute.xlu0 %830
    %v832 = vlaneseq
    %v833 = vshrl.u32 %v832, 7
    %v834 = vsub.s32 2, %v833
    %v835 = vrot.slane %v814, %v834
    %837 = vbcast.lane.b32.xlu0 %v835, 256
    %v838 = vpop.permute.xlu0 %837
    %v839 = vlaneseq
    %v840 = vshrl.u32 %v839, 7
    %v841 = vsub.s32 3, %v840
    %v842 = vrot.slane %v814, %v841
    %844 = vbcast.lane.b32.xlu0 %v842, 256
    %v845 = vpop.permute.xlu0 %844
    %v846 = vlaneseq
    %v847 = vshrl.u32 %v846, 7
    %v848 = vsub.s32 4, %v847
    %v849 = vrot.slane %v814, %v848
    %851 = vbcast.lane.b32.xlu0 %v849, 256
    %v852 = vpop.permute.xlu0 %851
    %v853 = vlaneseq
    %v854 = vshrl.u32 %v853, 7
    %v855 = vsub.s32 5, %v854
    %v856 = vrot.slane %v814, %v855
    %858 = vbcast.lane.b32.xlu0 %v856, 256
    %v859 = vpop.permute.xlu0 %858
    %v860 = vlaneseq
    %v861 = vshrl.u32 %v860, 7
    %v862 = vsub.s32 6, %v861
    %v863 = vrot.slane %v814, %v862
    %865 = vbcast.lane.b32.xlu0 %v863, 256
    %v866 = vpop.permute.xlu0 %865
    %v867 = vlaneseq
    %v868 = vshrl.u32 %v867, 7
    %v869 = vsub.s32 7, %v868
    %v870 = vrot.slane %v814, %v869
    %872 = vbcast.lane.b32.xlu0 %v870, 256
    %v873 = vpop.permute.xlu0 %872
    %v874 = vlaneseq
    %v875 = vshrl.u32 %v874, 7
    %v876 = vsub.s32 0, %v875
    %v877 = vrot.slane %v815, %v876
    %879 = vbcast.lane.b32.xlu0 %v877, 256
    %v880 = vpop.permute.xlu0 %879
    %v881 = vlaneseq
    %v882 = vshrl.u32 %v881, 7
    %v883 = vsub.s32 1, %v882
    %v884 = vrot.slane %v815, %v883
    %886 = vbcast.lane.b32.xlu0 %v884, 256
    %v887 = vpop.permute.xlu0 %886
    %v888 = vlaneseq
    %v889 = vshrl.u32 %v888, 7
    %v890 = vsub.s32 2, %v889
    %v891 = vrot.slane %v815, %v890
    %893 = vbcast.lane.b32.xlu0 %v891, 256
    %v894 = vpop.permute.xlu0 %893
    %v895 = vlaneseq
    %v896 = vshrl.u32 %v895, 7
    %v897 = vsub.s32 3, %v896
    %v898 = vrot.slane %v815, %v897
    %900 = vbcast.lane.b32.xlu0 %v898, 256
    %v901 = vpop.permute.xlu0 %900
    %v902 = vlaneseq
    %v903 = vshrl.u32 %v902, 7
    %v904 = vsub.s32 4, %v903
    %v905 = vrot.slane %v815, %v904
    %907 = vbcast.lane.b32.xlu0 %v905, 256
    %v908 = vpop.permute.xlu0 %907
    %v909 = vlaneseq
    %v910 = vshrl.u32 %v909, 7
    %v911 = vsub.s32 5, %v910
    %v912 = vrot.slane %v815, %v911
    %914 = vbcast.lane.b32.xlu0 %v912, 256
    %v915 = vpop.permute.xlu0 %914
    %v916 = vlaneseq
    %v917 = vshrl.u32 %v916, 7
    %v918 = vsub.s32 6, %v917
    %v919 = vrot.slane %v815, %v918
    %921 = vbcast.lane.b32.xlu0 %v919, 256
    %v922 = vpop.permute.xlu0 %921
    %v923 = vlaneseq
    %v924 = vshrl.u32 %v923, 7
    %v925 = vsub.s32 7, %v924
    %v926 = vrot.slane %v815, %v925
    %928 = vbcast.lane.b32.xlu0 %v926, 256
    %v929 = vpop.permute.xlu0 %928
    %v946 = vadd.f32 %v765, %v824
    %v947 = vadd.f32 %v768, %v831
    %v948 = vadd.f32 %v771, %v838
    %v949 = vadd.f32 %v774, %v845
    %v950 = vadd.f32 %v777, %v852
    %v951 = vadd.f32 %v780, %v859
    %v952 = vadd.f32 %v783, %v866
    %v953 = vadd.f32 %v786, %v873
    %v954 = vadd.f32 %v789, %v880
    %v955 = vadd.f32 %v792, %v887
    %v956 = vadd.f32 %v795, %v894
    %v957 = vadd.f32 %v798, %v901
    %v958 = vadd.f32 %v801, %v908
    %v959 = vadd.f32 %v804, %v915
    %v960 = vadd.f32 %v807, %v922
    %v961 = vadd.f32 %v810, %v929
    %963 = vset.pattern.permute.xlu0 0
    %964 = vperm.xlu0 %963, %v402
    %v965 = vpop.permute.xlu0 %964
    %968 = vset.pattern.permute.xlu0 0
    %969 = vperm.xlu0 %968, %v403
    %v970 = vpop.permute.xlu0 %969
    %988 = vset.pattern.permute.xlu0 0
    %989 = vperm.xlu0 %988, %v946
    %v990 = vpop.permute.xlu0 %989
    %991 = vset.pattern.permute.xlu0 0
    %992 = vperm.xlu0 %991, %v947
    %v993 = vpop.permute.xlu0 %992
    %994 = vset.pattern.permute.xlu0 0
    %995 = vperm.xlu0 %994, %v948
    %v996 = vpop.permute.xlu0 %995
    %997 = vset.pattern.permute.xlu0 0
    %998 = vperm.xlu0 %997, %v949
    %v999 = vpop.permute.xlu0 %998
    %1000 = vset.pattern.permute.xlu0 0
    %1001 = vperm.xlu0 %1000, %v950
    %v1002 = vpop.permute.xlu0 %1001
    %1003 = vset.pattern.permute.xlu0 0
    %1004 = vperm.xlu0 %1003, %v951
    %v1005 = vpop.permute.xlu0 %1004
    %1006 = vset.pattern.permute.xlu0 0
    %1007 = vperm.xlu0 %1006, %v952
    %v1008 = vpop.permute.xlu0 %1007
    %1009 = vset.pattern.permute.xlu0 0
    %1010 = vperm.xlu0 %1009, %v953
    %v1011 = vpop.permute.xlu0 %1010
    %1012 = vset.pattern.permute.xlu0 0
    %1013 = vperm.xlu0 %1012, %v954
    %v1014 = vpop.permute.xlu0 %1013
    %1015 = vset.pattern.permute.xlu0 0
    %1016 = vperm.xlu0 %1015, %v955
    %v1017 = vpop.permute.xlu0 %1016
    %1018 = vset.pattern.permute.xlu0 0
    %1019 = vperm.xlu0 %1018, %v956
    %v1020 = vpop.permute.xlu0 %1019
    %1021 = vset.pattern.permute.xlu0 0
    %1022 = vperm.xlu0 %1021, %v957
    %v1023 = vpop.permute.xlu0 %1022
    %1024 = vset.pattern.permute.xlu0 0
    %1025 = vperm.xlu0 %1024, %v958
    %v1026 = vpop.permute.xlu0 %1025
    %1027 = vset.pattern.permute.xlu0 0
    %1028 = vperm.xlu0 %1027, %v959
    %v1029 = vpop.permute.xlu0 %1028
    %1030 = vset.pattern.permute.xlu0 0
    %1031 = vperm.xlu0 %1030, %v960
    %v1032 = vpop.permute.xlu0 %1031
    %1033 = vset.pattern.permute.xlu0 0
    %1034 = vperm.xlu0 %1033, %v961
    %v1035 = vpop.permute.xlu0 %1034
    %v1036 = vlaneseq
    %v1037 = vshrl.u32 %v1036, 7
    %v1038 = vsub.s32 %v437, %v1037
    %v1039 = vrot.slane %v990, %v1038
    %v1040 = vlaneseq
    %v1041 = vshrl.u32 %v1040, 7
    %v1042 = vsub.s32 %v437, %v1041
    %v1043 = vrot.slane %v993, %v1042
    %v1044 = vlaneseq
    %v1045 = vshrl.u32 %v1044, 7
    %v1046 = vsub.s32 %v437, %v1045
    %v1047 = vrot.slane %v996, %v1046
    %v1048 = vlaneseq
    %v1049 = vshrl.u32 %v1048, 7
    %v1050 = vsub.s32 %v437, %v1049
    %v1051 = vrot.slane %v999, %v1050
    %v1052 = vlaneseq
    %v1053 = vshrl.u32 %v1052, 7
    %v1054 = vsub.s32 %v437, %v1053
    %v1055 = vrot.slane %v1002, %v1054
    %v1056 = vlaneseq
    %v1057 = vshrl.u32 %v1056, 7
    %v1058 = vsub.s32 %v437, %v1057
    %v1059 = vrot.slane %v1005, %v1058
    %v1060 = vlaneseq
    %v1061 = vshrl.u32 %v1060, 7
    %v1062 = vsub.s32 %v437, %v1061
    %v1063 = vrot.slane %v1008, %v1062
    %v1064 = vlaneseq
    %v1065 = vshrl.u32 %v1064, 7
    %v1066 = vsub.s32 %v437, %v1065
    %v1067 = vrot.slane %v1011, %v1066
    %v1068 = vlaneseq
    %v1069 = vshrl.u32 %v1068, 7
    %v1070 = vsub.s32 %v437, %v1069
    %v1071 = vrot.slane %v1014, %v1070
    %v1072 = vlaneseq
    %v1073 = vshrl.u32 %v1072, 7
    %v1074 = vsub.s32 %v437, %v1073
    %v1075 = vrot.slane %v1017, %v1074
    %v1076 = vlaneseq
    %v1077 = vshrl.u32 %v1076, 7
    %v1078 = vsub.s32 %v437, %v1077
    %v1079 = vrot.slane %v1020, %v1078
    %v1080 = vlaneseq
    %v1081 = vshrl.u32 %v1080, 7
    %v1082 = vsub.s32 %v437, %v1081
    %v1083 = vrot.slane %v1023, %v1082
    %v1084 = vlaneseq
    %v1085 = vshrl.u32 %v1084, 7
    %v1086 = vsub.s32 %v437, %v1085
    %v1087 = vrot.slane %v1026, %v1086
    %v1088 = vlaneseq
    %v1089 = vshrl.u32 %v1088, 7
    %v1090 = vsub.s32 %v437, %v1089
    %v1091 = vrot.slane %v1029, %v1090
    %v1092 = vlaneseq
    %v1093 = vshrl.u32 %v1092, 7
    %v1094 = vsub.s32 %v437, %v1093
    %v1095 = vrot.slane %v1032, %v1094
    %v1096 = vlaneseq
    %v1097 = vshrl.u32 %v1096, 7
    %v1098 = vsub.s32 %v437, %v1097
    %v1099 = vrot.slane %v1035, %v1098
    %v1100 = vsel %vm737, %v1043, %v1039
    %v1101 = vsel %vm738, %v1047, %v1100
    %v1102 = vsel %vm740, %v1051, %v1101
    %vm1103 = vcmask 1044484
    %v1104 = vsel %vm1103, %v1055, %v1102
    %vm1105 = vcmask 1045509
    %v1106 = vsel %vm1105, %v1059, %v1104
    %vm1107 = vcmask 1046534
    %v1108 = vsel %vm1107, %v1063, %v1106
    %vm1109 = vcmask 1047559
    %v1110 = vsel %vm1109, %v1067, %v1108
    %v1111 = vsel %vm737, %v1075, %v1071
    %v1112 = vsel %vm738, %v1079, %v1111
    %v1113 = vsel %vm740, %v1083, %v1112
    %v1114 = vsel %vm1103, %v1087, %v1113
    %v1115 = vsel %vm1105, %v1091, %v1114
    %v1116 = vsel %vm1107, %v1095, %v1115
    %v1117 = vsel %vm1109, %v1099, %v1116
    %v1120 = vadd.f32 %v965, %v1110
    %v1121 = vadd.f32 %v970, %v1117
    %vm1122 = vcmp.ne.f32.partialorder %v220, 0.0
    %vm1123 = vcmp.ne.f32.partialorder %v221, 0.0
    %v1124 = vsel %vm1122, %v1120, -1e+09
    %v1125 = vsel %vm1123, %v1121, -1e+09
    %vm1126 = vcmask 31744
    %v1127 = vsel %vm1126, %v1124, -inf
    %1128 = vmax.xlane.f32.xlu0 %v1127
    %v1129 = vpop.xlane.xlu0 %1128
    %v1130 = vsel %vm1126, %v1125, -inf
    %1131 = vmax.xlane.f32.xlu0 %v1130
    %v1132 = vpop.xlane.xlu0 %1131
    %v1133 = vsub.f32 %v1124, %v1129
    %v1134 = vsub.f32 %v1125, %v1132
    %v1135 = vmul.f32 %v1133, 1.442695
    %v1136 = vpow.pop %v1135
    %v1137 = vmul.f32 %v1134, 1.442695
    %v1138 = vpow.pop %v1137
    %v1139 = vsel %vm1126, %v1136, 0.0
    %1140 = vadd.xlane.f32.xlu0 %v1139
    %v1141 = vpop.xlane.xlu0 %1140
    %v1142 = vsel %vm1126, %v1138, 0.0
    %1143 = vadd.xlane.f32.xlu0 %v1142
    %v1144 = vpop.xlane.xlu0 %1143
    %v1145 = vrcp.pop %v1141
    %v1146 = vrcp.pop %v1144
    %v1147 = vmul.f32 %v1136, %v1145
    %v1148 = vmul.f32 %v1138, %v1146
    %v1149 = vlaneseq
    %v1150 = vshrl.u32 %v1149, 7
    %v1151 = vsub.s32 0, %v1150
    %v1152 = vrot.slane %v1147, %v1151
    %1154 = vbcast.lane.b32.xlu0 %v1152, 256
    %v1155 = vpop.permute.xlu0 %1154
    %v1156 = vlaneseq
    %v1157 = vshrl.u32 %v1156, 7
    %v1158 = vsub.s32 1, %v1157
    %v1159 = vrot.slane %v1147, %v1158
    %1161 = vbcast.lane.b32.xlu0 %v1159, 256
    %v1162 = vpop.permute.xlu0 %1161
    %v1163 = vlaneseq
    %v1164 = vshrl.u32 %v1163, 7
    %v1165 = vsub.s32 2, %v1164
    %v1166 = vrot.slane %v1147, %v1165
    %1168 = vbcast.lane.b32.xlu0 %v1166, 256
    %v1169 = vpop.permute.xlu0 %1168
    %v1170 = vlaneseq
    %v1171 = vshrl.u32 %v1170, 7
    %v1172 = vsub.s32 3, %v1171
    %v1173 = vrot.slane %v1147, %v1172
    %1175 = vbcast.lane.b32.xlu0 %v1173, 256
    %v1176 = vpop.permute.xlu0 %1175
    %v1177 = vlaneseq
    %v1178 = vshrl.u32 %v1177, 7
    %v1179 = vsub.s32 4, %v1178
    %v1180 = vrot.slane %v1147, %v1179
    %1182 = vbcast.lane.b32.xlu0 %v1180, 256
    %v1183 = vpop.permute.xlu0 %1182
    %v1184 = vlaneseq
    %v1185 = vshrl.u32 %v1184, 7
    %v1186 = vsub.s32 5, %v1185
    %v1187 = vrot.slane %v1147, %v1186
    %1189 = vbcast.lane.b32.xlu0 %v1187, 256
    %v1190 = vpop.permute.xlu0 %1189
    %v1191 = vlaneseq
    %v1192 = vshrl.u32 %v1191, 7
    %v1193 = vsub.s32 6, %v1192
    %v1194 = vrot.slane %v1147, %v1193
    %1196 = vbcast.lane.b32.xlu0 %v1194, 256
    %v1197 = vpop.permute.xlu0 %1196
    %v1198 = vlaneseq
    %v1199 = vshrl.u32 %v1198, 7
    %v1200 = vsub.s32 7, %v1199
    %v1201 = vrot.slane %v1147, %v1200
    %1203 = vbcast.lane.b32.xlu0 %v1201, 256
    %v1204 = vpop.permute.xlu0 %1203
    %v1205 = vlaneseq
    %v1206 = vshrl.u32 %v1205, 7
    %v1207 = vsub.s32 0, %v1206
    %v1208 = vrot.slane %v1148, %v1207
    %1210 = vbcast.lane.b32.xlu0 %v1208, 256
    %v1211 = vpop.permute.xlu0 %1210
    %v1212 = vlaneseq
    %v1213 = vshrl.u32 %v1212, 7
    %v1214 = vsub.s32 1, %v1213
    %v1215 = vrot.slane %v1148, %v1214
    %1217 = vbcast.lane.b32.xlu0 %v1215, 256
    %v1218 = vpop.permute.xlu0 %1217
    %v1219 = vlaneseq
    %v1220 = vshrl.u32 %v1219, 7
    %v1221 = vsub.s32 2, %v1220
    %v1222 = vrot.slane %v1148, %v1221
    %1224 = vbcast.lane.b32.xlu0 %v1222, 256
    %v1225 = vpop.permute.xlu0 %1224
    %v1226 = vlaneseq
    %v1227 = vshrl.u32 %v1226, 7
    %v1228 = vsub.s32 3, %v1227
    %v1229 = vrot.slane %v1148, %v1228
    %1231 = vbcast.lane.b32.xlu0 %v1229, 256
    %v1232 = vpop.permute.xlu0 %1231
    %v1233 = vlaneseq
    %v1234 = vshrl.u32 %v1233, 7
    %v1235 = vsub.s32 4, %v1234
    %v1236 = vrot.slane %v1148, %v1235
    %1238 = vbcast.lane.b32.xlu0 %v1236, 256
    %v1239 = vpop.permute.xlu0 %1238
    %v1240 = vlaneseq
    %v1241 = vshrl.u32 %v1240, 7
    %v1242 = vsub.s32 5, %v1241
    %v1243 = vrot.slane %v1148, %v1242
    %1245 = vbcast.lane.b32.xlu0 %v1243, 256
    %v1246 = vpop.permute.xlu0 %1245
    %v1247 = vlaneseq
    %v1248 = vshrl.u32 %v1247, 7
    %v1249 = vsub.s32 6, %v1248
    %v1250 = vrot.slane %v1148, %v1249
    %1252 = vbcast.lane.b32.xlu0 %v1250, 256
    %v1253 = vpop.permute.xlu0 %1252
    %v1254 = vlaneseq
    %v1255 = vshrl.u32 %v1254, 7
    %v1256 = vsub.s32 7, %v1255
    %v1257 = vrot.slane %v1148, %v1256
    %1259 = vbcast.lane.b32.xlu0 %v1257, 256
    %v1260 = vpop.permute.xlu0 %1259
    %v1261 = vmul.f32 %v1155, %v711
    %v1262 = vmul.f32 %v1162, %v712
    %v1263 = vmul.f32 %v1169, %v713
    %v1264 = vmul.f32 %v1176, %v714
    %v1265 = vmul.f32 %v1183, %v715
    %v1266 = vmul.f32 %v1190, %v716
    %v1267 = vmul.f32 %v1197, %v717
    %v1268 = vmul.f32 %v1204, %v718
    %v1269 = vmul.f32 %v1211, %v719
    %v1270 = vmul.f32 %v1218, %v720
    %v1271 = vmul.f32 %v1225, %v721
    %v1272 = vmul.f32 %v1232, %v722
    %v1273 = vmul.f32 %v1239, %v723
    %v1274 = vmul.f32 %v1246, %v724
    %v1275 = vmul.f32 %v1253, %v725
    %v1276 = vmul.f32 %v1260, %v726
    %v1277 = vsel %vm762, %v1261, 0.0
    %v1278 = vrot.slane %v1277, 4
    %v1279 = vadd.f32 %v1277, %v1278
    %v1280 = vrot.slane %v1279, 2
    %v1281 = vadd.f32 %v1279, %v1280
    %v1282 = vrot.slane %v1281, 1
    %v1283 = vadd.f32 %v1281, %v1282
    %v1284 = vsel %vm762, %v1262, 0.0
    %v1285 = vrot.slane %v1284, 4
    %v1286 = vadd.f32 %v1284, %v1285
    %v1287 = vrot.slane %v1286, 2
    %v1288 = vadd.f32 %v1286, %v1287
    %v1289 = vrot.slane %v1288, 1
    %v1290 = vadd.f32 %v1288, %v1289
    %v1291 = vsel %vm762, %v1263, 0.0
    %v1292 = vrot.slane %v1291, 4
    %v1293 = vadd.f32 %v1291, %v1292
    %v1294 = vrot.slane %v1293, 2
    %v1295 = vadd.f32 %v1293, %v1294
    %v1296 = vrot.slane %v1295, 1
    %v1297 = vadd.f32 %v1295, %v1296
    %v1298 = vsel %vm762, %v1264, 0.0
    %v1299 = vrot.slane %v1298, 4
    %v1300 = vadd.f32 %v1298, %v1299
    %v1301 = vrot.slane %v1300, 2
    %v1302 = vadd.f32 %v1300, %v1301
    %v1303 = vrot.slane %v1302, 1
    %v1304 = vadd.f32 %v1302, %v1303
    %v1305 = vsel %vm762, %v1265, 0.0
    %v1306 = vrot.slane %v1305, 4
    %v1307 = vadd.f32 %v1305, %v1306
    %v1308 = vrot.slane %v1307, 2
    %v1309 = vadd.f32 %v1307, %v1308
    %v1310 = vrot.slane %v1309, 1
    %v1311 = vadd.f32 %v1309, %v1310
    %v1312 = vsel %vm762, %v1266, 0.0
    %v1313 = vrot.slane %v1312, 4
    %v1314 = vadd.f32 %v1312, %v1313
    %v1315 = vrot.slane %v1314, 2
    %v1316 = vadd.f32 %v1314, %v1315
    %v1317 = vrot.slane %v1316, 1
    %v1318 = vadd.f32 %v1316, %v1317
    %v1319 = vsel %vm762, %v1267, 0.0
    %v1320 = vrot.slane %v1319, 4
    %v1321 = vadd.f32 %v1319, %v1320
    %v1322 = vrot.slane %v1321, 2
    %v1323 = vadd.f32 %v1321, %v1322
    %v1324 = vrot.slane %v1323, 1
    %v1325 = vadd.f32 %v1323, %v1324
    %v1326 = vsel %vm762, %v1268, 0.0
    %v1327 = vrot.slane %v1326, 4
    %v1328 = vadd.f32 %v1326, %v1327
    %v1329 = vrot.slane %v1328, 2
    %v1330 = vadd.f32 %v1328, %v1329
    %v1331 = vrot.slane %v1330, 1
    %v1332 = vadd.f32 %v1330, %v1331
    %v1333 = vsel %vm762, %v1269, 0.0
    %v1334 = vrot.slane %v1333, 4
    %v1335 = vadd.f32 %v1333, %v1334
    %v1336 = vrot.slane %v1335, 2
    %v1337 = vadd.f32 %v1335, %v1336
    %v1338 = vrot.slane %v1337, 1
    %v1339 = vadd.f32 %v1337, %v1338
    %v1340 = vsel %vm762, %v1270, 0.0
    %v1341 = vrot.slane %v1340, 4
    %v1342 = vadd.f32 %v1340, %v1341
    %v1343 = vrot.slane %v1342, 2
    %v1344 = vadd.f32 %v1342, %v1343
    %v1345 = vrot.slane %v1344, 1
    %v1346 = vadd.f32 %v1344, %v1345
    %v1347 = vsel %vm762, %v1271, 0.0
    %v1348 = vrot.slane %v1347, 4
    %v1349 = vadd.f32 %v1347, %v1348
    %v1350 = vrot.slane %v1349, 2
    %v1351 = vadd.f32 %v1349, %v1350
    %v1352 = vrot.slane %v1351, 1
    %v1353 = vadd.f32 %v1351, %v1352
    %v1354 = vsel %vm762, %v1272, 0.0
    %v1355 = vrot.slane %v1354, 4
    %v1356 = vadd.f32 %v1354, %v1355
    %v1357 = vrot.slane %v1356, 2
    %v1358 = vadd.f32 %v1356, %v1357
    %v1359 = vrot.slane %v1358, 1
    %v1360 = vadd.f32 %v1358, %v1359
    %v1361 = vsel %vm762, %v1273, 0.0
    %v1362 = vrot.slane %v1361, 4
    %v1363 = vadd.f32 %v1361, %v1362
    %v1364 = vrot.slane %v1363, 2
    %v1365 = vadd.f32 %v1363, %v1364
    %v1366 = vrot.slane %v1365, 1
    %v1367 = vadd.f32 %v1365, %v1366
    %v1368 = vsel %vm762, %v1274, 0.0
    %v1369 = vrot.slane %v1368, 4
    %v1370 = vadd.f32 %v1368, %v1369
    %v1371 = vrot.slane %v1370, 2
    %v1372 = vadd.f32 %v1370, %v1371
    %v1373 = vrot.slane %v1372, 1
    %v1374 = vadd.f32 %v1372, %v1373
    %v1375 = vsel %vm762, %v1275, 0.0
    %v1376 = vrot.slane %v1375, 4
    %v1377 = vadd.f32 %v1375, %v1376
    %v1378 = vrot.slane %v1377, 2
    %v1379 = vadd.f32 %v1377, %v1378
    %v1380 = vrot.slane %v1379, 1
    %v1381 = vadd.f32 %v1379, %v1380
    %v1382 = vsel %vm762, %v1276, 0.0
    %v1383 = vrot.slane %v1382, 4
    %v1384 = vadd.f32 %v1382, %v1383
    %v1385 = vrot.slane %v1384, 2
    %v1386 = vadd.f32 %v1384, %v1385
    %v1387 = vrot.slane %v1386, 1
    %v1388 = vadd.f32 %v1386, %v1387
    %v1389 = vmul.f32 %v1147, %v434
    %v1390 = vmul.f32 %v1148, %v435
    %v1391 = vmul.f32 %v1389, %v220
    %v1392 = vmul.f32 %v1390, %v221
    %v1393 = vsel %vm1126, %v1391, 0.0
    %1394 = vadd.xlane.f32.xlu0 %v1393
    %v1395 = vpop.xlane.xlu0 %1394
    %v1396 = vsel %vm1126, %v1392, 0.0
    %1397 = vadd.xlane.f32.xlu0 %v1396
    %v1398 = vpop.xlane.xlu0 %1397
    %v1400 = vlaneseq
    %v1401 = vshrl.u32 %v1400, 7
    %v1402 = vsub.s32 0, %v1401
    %v1403 = vrot.slane %v316, %v1402
    %v1405 = vmul.f32 %v1395, %v1403
    %v1406 = vmul.f32 %v1398, %v1403
    %v1415 = vsel %vm737, %v1290, %v1283
    %v1416 = vsel %vm738, %v1297, %v1415
    %v1417 = vsel %vm740, %v1304, %v1416
    %v1418 = vsel %vm1103, %v1311, %v1417
    %v1419 = vsel %vm1105, %v1318, %v1418
    %v1420 = vsel %vm1107, %v1325, %v1419
    %v1421 = vsel %vm1109, %v1332, %v1420
    %vm1422 = vcmask 64512
    %v1423 = vsel %vm1422, %v1421, 0
    %1425 = vmatprep.subr.mxu0 0.0
    %1426 = vmatpush1.msra.mxu0 %v308
    %1427 = vmatprep.subr.mxu0 0.0
    %1428 = vmatpush1.msra.mxu0 0.0
    %1429 = vmatprep.subr.mxu0 0.0
    %1430 = vmatpush1.msra.mxu0 0.0
    %1431 = vmatprep.subr.mxu0 0.0
    %1432 = vmatpush1.msra.mxu0 0.0
    %1433 = vmatprep.subr.mxu0 0.0
    %1434 = vmatpush1.msra.mxu0 0.0
    %1435 = vmatprep.subr.mxu0 0.0
    %1436 = vmatpush1.msra.mxu0 0.0
    %1437 = vmatprep.subr.mxu0 0.0
    %1438 = vmatpush1.msra.mxu0 0.0
    %1439 = vmatprep.subr.mxu0 0.0
    %1440 = vmatpush1.msra.mxu0 0.0
    %1441 = vmatprep.subr.mxu0 0.0
    %1442 = vmatpush1.msra.mxu0 0.0
    %1443 = vmatprep.subr.mxu0 0.0
    %1444 = vmatpush1.msra.mxu0 0.0
    %1445 = vmatprep.subr.mxu0 0.0
    %1446 = vmatpush1.msra.mxu0 0.0
    %1447 = vmatprep.subr.mxu0 0.0
    %1448 = vmatpush1.msra.mxu0 0.0
    %1449 = vmatprep.subr.mxu0 0.0
    %1450 = vmatpush1.msra.mxu0 0.0
    %1451 = vmatprep.subr.mxu0 0.0
    %1452 = vmatpush1.msra.mxu0 0.0
    %1453 = vmatprep.subr.mxu0 0.0
    %1454 = vmatpush1.msra.mxu0 0.0
    %1455 = vmatprep.subr.mxu0 0.0
    %1456 = vmatpush1.msra.mxu0 0.0
    %1457 = vmatprep.subr.mxu0 0.0
    %1458 = vmatpush1.msra.mxu0 0.0
    %1459 = vmatprep.subr.mxu0 0.0
    %1460 = vmatpush1.msra.mxu0 0.0
    %1461 = vmatprep.subr.mxu0 0.0
    %1462 = vmatpush1.msra.mxu0 0.0
    %1463 = vmatprep.subr.mxu0 0.0
    %1464 = vmatpush1.msra.mxu0 0.0
    %1465 = vmatprep.subr.mxu0 0.0
    %1466 = vmatpush1.msra.mxu0 0.0
    %1467 = vmatprep.subr.mxu0 0.0
    %1468 = vmatpush1.msra.mxu0 0.0
    %1469 = vmatprep.subr.mxu0 0.0
    %1470 = vmatpush1.msra.mxu0 0.0
    %1471 = vmatprep.subr.mxu0 0.0
    %1472 = vmatpush1.msra.mxu0 0.0
    %1473 = vmatprep.subr.mxu0 0.0
    %1474 = vmatpush1.msra.mxu0 0.0
    %1475 = vmatprep.subr.mxu0 0.0
    %1476 = vmatpush1.msra.mxu0 0.0
    %1477 = vmatprep.subr.mxu0 0.0
    %1478 = vmatpush1.msra.mxu0 0.0
    %1479 = vmatprep.subr.mxu0 0.0
    %1480 = vmatpush1.msra.mxu0 0.0
    %1481 = vmatprep.subr.mxu0 0.0
    %1482 = vmatpush1.msra.mxu0 0.0
    %1483 = vmatprep.subr.mxu0 0.0
    %1484 = vmatpush1.msra.mxu0 0.0
    %1485 = vmatprep.subr.mxu0 0.0
    %1486 = vmatpush1.msra.mxu0 0.0
    %1487 = vmatprep.subr.mxu0 0.0
    %1488 = vmatpush1.msra.mxu0 0.0
    %1489 = vmatprep.mubr.f32.mxu0 0.0
    %1490 = vmatmul.mubr.f32.gmra.mrb[0].mxu0 %v1423
    %v1491 = vpop.f32.mrb[0].mxu0
    %v1492 = vadd.f32 %v1405, %v1491
    %v1493 = vpop.f32.mrb[0].mxu0
    %1494 = vdwg.mxu0
    %v1503 = vsel %vm737, %v1346, %v1339
    %v1504 = vsel %vm738, %v1353, %v1503
    %v1505 = vsel %vm740, %v1360, %v1504
    %v1506 = vsel %vm1103, %v1367, %v1505
    %v1507 = vsel %vm1105, %v1374, %v1506
    %v1508 = vsel %vm1107, %v1381, %v1507
    %v1509 = vsel %vm1109, %v1388, %v1508
    %v1510 = vsel %vm1422, %v1509, 0
    %1512 = vmatprep.subr.mxu0 0.0
    %1513 = vmatpush1.msra.mxu0 %v313
    %1514 = vmatprep.subr.mxu0 0.0
    %1515 = vmatpush1.msra.mxu0 0.0
    %1516 = vmatprep.subr.mxu0 0.0
    %1517 = vmatpush1.msra.mxu0 0.0
    %1518 = vmatprep.subr.mxu0 0.0
    %1519 = vmatpush1.msra.mxu0 0.0
    %1520 = vmatprep.subr.mxu0 0.0
    %1521 = vmatpush1.msra.mxu0 0.0
    %1522 = vmatprep.subr.mxu0 0.0
    %1523 = vmatpush1.msra.mxu0 0.0
    %1524 = vmatprep.subr.mxu0 0.0
    %1525 = vmatpush1.msra.mxu0 0.0
    %1526 = vmatprep.subr.mxu0 0.0
    %1527 = vmatpush1.msra.mxu0 0.0
    %1528 = vmatprep.subr.mxu0 0.0
    %1529 = vmatpush1.msra.mxu0 0.0
    %1530 = vmatprep.subr.mxu0 0.0
    %1531 = vmatpush1.msra.mxu0 0.0
    %1532 = vmatprep.subr.mxu0 0.0
    %1533 = vmatpush1.msra.mxu0 0.0
    %1534 = vmatprep.subr.mxu0 0.0
    %1535 = vmatpush1.msra.mxu0 0.0
    %1536 = vmatprep.subr.mxu0 0.0
    %1537 = vmatpush1.msra.mxu0 0.0
    %1538 = vmatprep.subr.mxu0 0.0
    %1539 = vmatpush1.msra.mxu0 0.0
    %1540 = vmatprep.subr.mxu0 0.0
    %1541 = vmatpush1.msra.mxu0 0.0
    %1542 = vmatprep.subr.mxu0 0.0
    %1543 = vmatpush1.msra.mxu0 0.0
    %1544 = vmatprep.subr.mxu0 0.0
    %1545 = vmatpush1.msra.mxu0 0.0
    %1546 = vmatprep.subr.mxu0 0.0
    %1547 = vmatpush1.msra.mxu0 0.0
    %1548 = vmatprep.subr.mxu0 0.0
    %1549 = vmatpush1.msra.mxu0 0.0
    %1550 = vmatprep.subr.mxu0 0.0
    %1551 = vmatpush1.msra.mxu0 0.0
    %1552 = vmatprep.subr.mxu0 0.0
    %1553 = vmatpush1.msra.mxu0 0.0
    %1554 = vmatprep.subr.mxu0 0.0
    %1555 = vmatpush1.msra.mxu0 0.0
    %1556 = vmatprep.subr.mxu0 0.0
    %1557 = vmatpush1.msra.mxu0 0.0
    %1558 = vmatprep.subr.mxu0 0.0
    %1559 = vmatpush1.msra.mxu0 0.0
    %1560 = vmatprep.subr.mxu0 0.0
    %1561 = vmatpush1.msra.mxu0 0.0
    %1562 = vmatprep.subr.mxu0 0.0
    %1563 = vmatpush1.msra.mxu0 0.0
    %1564 = vmatprep.subr.mxu0 0.0
    %1565 = vmatpush1.msra.mxu0 0.0
    %1566 = vmatprep.subr.mxu0 0.0
    %1567 = vmatpush1.msra.mxu0 0.0
    %1568 = vmatprep.subr.mxu0 0.0
    %1569 = vmatpush1.msra.mxu0 0.0
    %1570 = vmatprep.subr.mxu0 0.0
    %1571 = vmatpush1.msra.mxu0 0.0
    %1572 = vmatprep.subr.mxu0 0.0
    %1573 = vmatpush1.msra.mxu0 0.0
    %1574 = vmatprep.subr.mxu0 0.0
    %1575 = vmatpush1.msra.mxu0 0.0
    %1576 = vmatprep.mubr.f32.mxu0 0.0
    %1577 = vmatmul.mubr.f32.gmra.mrb[0].mxu0 %v1510
    %v1578 = vpop.f32.mrb[0].mxu0
    %v1579 = vadd.f32 %v1406, %v1578
    %v1580 = vpop.f32.mrb[0].mxu0
    %1581 = vdwg.mxu0
    %v1582 = vld [vmem:[%s13] sm:$0xff]
    %v1583 = vld [vmem:[%s13 + $0x8] sm:$0xff]
    %v1584 = vld [vmem:[%s13 + $0x10] sm:$0xff]
    %v1585 = vld [vmem:[%s13 + $0x18] sm:$0xff]
    %v1586 = vld [vmem:[%s14] sm:$0xff]
    %v1587 = vld [vmem:[%s14 + $0x8] sm:$0xff]
    %v1588 = vld [vmem:[%s14 + $0x10] sm:$0xff]
    %v1589 = vld [vmem:[%s14 + $0x18] sm:$0xff]
    %v1591 = vsel %vm234, %v222, 0
    %v1594 = vsel %vm234, %v223, 0
    %1596 = vmatprep.subr.mxu0 0.0
    %1597 = vmatpush1.msra.mxu0 %v1586
    %1598 = vmatprep.subr.mxu0 0.0
    %1599 = vmatpush1.msra.mxu0 %v1587
    %1600 = vmatprep.subr.mxu0 0.0
    %1601 = vmatpush1.msra.mxu0 %v1588
    %1602 = vmatprep.subr.mxu0 0.0
    %1603 = vmatpush1.msra.mxu0 %v1589
    %1604 = vmatprep.subr.mxu0 0.0
    %1605 = vmatpush1.msra.mxu0 0.0
    %1606 = vmatprep.subr.mxu0 0.0
    %1607 = vmatpush1.msra.mxu0 0.0
    %1608 = vmatprep.subr.mxu0 0.0
    %1609 = vmatpush1.msra.mxu0 0.0
    %1610 = vmatprep.subr.mxu0 0.0
    %1611 = vmatpush1.msra.mxu0 0.0
    %1612 = vmatprep.subr.mxu0 0.0
    %1613 = vmatpush1.msra.mxu0 0.0
    %1614 = vmatprep.subr.mxu0 0.0
    %1615 = vmatpush1.msra.mxu0 0.0
    %1616 = vmatprep.subr.mxu0 0.0
    %1617 = vmatpush1.msra.mxu0 0.0
    %1618 = vmatprep.subr.mxu0 0.0
    %1619 = vmatpush1.msra.mxu0 0.0
    %1620 = vmatprep.subr.mxu0 0.0
    %1621 = vmatpush1.msra.mxu0 0.0
    %1622 = vmatprep.subr.mxu0 0.0
    %1623 = vmatpush1.msra.mxu0 0.0
    %1624 = vmatprep.subr.mxu0 0.0
    %1625 = vmatpush1.msra.mxu0 0.0
    %1626 = vmatprep.subr.mxu0 0.0
    %1627 = vmatpush1.msra.mxu0 0.0
    %1628 = vmatprep.subr.mxu0 0.0
    %1629 = vmatpush1.msra.mxu0 0.0
    %1630 = vmatprep.subr.mxu0 0.0
    %1631 = vmatpush1.msra.mxu0 0.0
    %1632 = vmatprep.subr.mxu0 0.0
    %1633 = vmatpush1.msra.mxu0 0.0
    %1634 = vmatprep.subr.mxu0 0.0
    %1635 = vmatpush1.msra.mxu0 0.0
    %1636 = vmatprep.subr.mxu0 0.0
    %1637 = vmatpush1.msra.mxu0 0.0
    %1638 = vmatprep.subr.mxu0 0.0
    %1639 = vmatpush1.msra.mxu0 0.0
    %1640 = vmatprep.subr.mxu0 0.0
    %1641 = vmatpush1.msra.mxu0 0.0
    %1642 = vmatprep.subr.mxu0 0.0
    %1643 = vmatpush1.msra.mxu0 0.0
    %1644 = vmatprep.subr.mxu0 0.0
    %1645 = vmatpush1.msra.mxu0 0.0
    %1646 = vmatprep.subr.mxu0 0.0
    %1647 = vmatpush1.msra.mxu0 0.0
    %1648 = vmatprep.subr.mxu0 0.0
    %1649 = vmatpush1.msra.mxu0 0.0
    %1650 = vmatprep.subr.mxu0 0.0
    %1651 = vmatpush1.msra.mxu0 0.0
    %1652 = vmatprep.subr.mxu0 0.0
    %1653 = vmatpush1.msra.mxu0 0.0
    %1654 = vmatprep.subr.mxu0 0.0
    %1655 = vmatpush1.msra.mxu0 0.0
    %1656 = vmatprep.subr.mxu0 0.0
    %1657 = vmatpush1.msra.mxu0 0.0
    %1658 = vmatprep.subr.mxu0 0.0
    %1659 = vmatpush1.msra.mxu0 0.0
    %1660 = vmatprep.mubr.f32.mxu0 0.0
    %1661 = vmatmul.mubr.f32.gmra.mrb[0].mxu0 %v1591
    %v1662 = vpop.f32.mrb[0].mxu0
    %v1663 = vadd.f32 0.0, %v1662
    %v1664 = vpop.f32.mrb[0].mxu0
    %1665 = vmatprep.mubr.f32.mxu0 0.0
    %1666 = vmatmul.mubr.f32.gmra.mrb[0].mxu0 %v1594
    %v1667 = vpop.f32.mrb[0].mxu0
    %v1668 = vadd.f32 0.0, %v1667
    %v1669 = vpop.f32.mrb[0].mxu0
    %1670 = vdwg.mxu0
    %v1672 = vsel %vm234, %v224, 0
    %v1675 = vsel %vm234, %v225, 0
    %1677 = vmatprep.subr.mxu0 0.0
    %1678 = vmatpush1.msra.mxu0 %v1582
    %1679 = vmatprep.subr.mxu0 0.0
    %1680 = vmatpush1.msra.mxu0 %v1583
    %1681 = vmatprep.subr.mxu0 0.0
    %1682 = vmatpush1.msra.mxu0 %v1584
    %1683 = vmatprep.subr.mxu0 0.0
    %1684 = vmatpush1.msra.mxu0 %v1585
    %1685 = vmatprep.subr.mxu0 0.0
    %1686 = vmatpush1.msra.mxu0 0.0
    %1687 = vmatprep.subr.mxu0 0.0
    %1688 = vmatpush1.msra.mxu0 0.0
    %1689 = vmatprep.subr.mxu0 0.0
    %1690 = vmatpush1.msra.mxu0 0.0
    %1691 = vmatprep.subr.mxu0 0.0
    %1692 = vmatpush1.msra.mxu0 0.0
    %1693 = vmatprep.subr.mxu0 0.0
    %1694 = vmatpush1.msra.mxu0 0.0
    %1695 = vmatprep.subr.mxu0 0.0
    %1696 = vmatpush1.msra.mxu0 0.0
    %1697 = vmatprep.subr.mxu0 0.0
    %1698 = vmatpush1.msra.mxu0 0.0
    %1699 = vmatprep.subr.mxu0 0.0
    %1700 = vmatpush1.msra.mxu0 0.0
    %1701 = vmatprep.subr.mxu0 0.0
    %1702 = vmatpush1.msra.mxu0 0.0
    %1703 = vmatprep.subr.mxu0 0.0
    %1704 = vmatpush1.msra.mxu0 0.0
    %1705 = vmatprep.subr.mxu0 0.0
    %1706 = vmatpush1.msra.mxu0 0.0
    %1707 = vmatprep.subr.mxu0 0.0
    %1708 = vmatpush1.msra.mxu0 0.0
    %1709 = vmatprep.subr.mxu0 0.0
    %1710 = vmatpush1.msra.mxu0 0.0
    %1711 = vmatprep.subr.mxu0 0.0
    %1712 = vmatpush1.msra.mxu0 0.0
    %1713 = vmatprep.subr.mxu0 0.0
    %1714 = vmatpush1.msra.mxu0 0.0
    %1715 = vmatprep.subr.mxu0 0.0
    %1716 = vmatpush1.msra.mxu0 0.0
    %1717 = vmatprep.subr.mxu0 0.0
    %1718 = vmatpush1.msra.mxu0 0.0
    %1719 = vmatprep.subr.mxu0 0.0
    %1720 = vmatpush1.msra.mxu0 0.0
    %1721 = vmatprep.subr.mxu0 0.0
    %1722 = vmatpush1.msra.mxu0 0.0
    %1723 = vmatprep.subr.mxu0 0.0
    %1724 = vmatpush1.msra.mxu0 0.0
    %1725 = vmatprep.subr.mxu0 0.0
    %1726 = vmatpush1.msra.mxu0 0.0
    %1727 = vmatprep.subr.mxu0 0.0
    %1728 = vmatpush1.msra.mxu0 0.0
    %1729 = vmatprep.subr.mxu0 0.0
    %1730 = vmatpush1.msra.mxu0 0.0
    %1731 = vmatprep.subr.mxu0 0.0
    %1732 = vmatpush1.msra.mxu0 0.0
    %1733 = vmatprep.subr.mxu0 0.0
    %1734 = vmatpush1.msra.mxu0 0.0
    %1735 = vmatprep.subr.mxu0 0.0
    %1736 = vmatpush1.msra.mxu0 0.0
    %1737 = vmatprep.subr.mxu0 0.0
    %1738 = vmatpush1.msra.mxu0 0.0
    %1739 = vmatprep.subr.mxu0 0.0
    %1740 = vmatpush1.msra.mxu0 0.0
    %1741 = vmatprep.mubr.f32.mxu0 0.0
    %1742 = vmatmul.mubr.f32.gmra.mrb[0].mxu0 %v1672
    %v1743 = vpop.f32.mrb[0].mxu0
    %v1744 = vadd.f32 %v1663, %v1743
    %v1745 = vpop.f32.mrb[0].mxu0
    %1746 = vmatprep.mubr.f32.mxu0 0.0
    %1747 = vmatmul.mubr.f32.gmra.mrb[0].mxu0 %v1675
    %v1748 = vpop.f32.mrb[0].mxu0
    %v1749 = vadd.f32 %v1668, %v1748
    %v1750 = vpop.f32.mrb[0].mxu0
    %1751 = vdwg.mxu0
    %v1752 = vld [vmem:[#allocation16] sm:$0xff]
    %v1753 = vld [vmem:[#allocation16 + $0x8] sm:$0xff]
    %v1754 = vld [vmem:[#allocation16 + $0x10] sm:$0xff]
    %v1755 = vld [vmem:[#allocation16 + $0x18] sm:$0xff]
    %v1757 = vsel %vm234, %v1492, 0
    %v1760 = vsel %vm234, %v1579, 0
    %1762 = vmatprep.subr.mxu0 0.0
    %1763 = vmatpush1.msra.mxu0 %v1752
    %1764 = vmatprep.subr.mxu0 0.0
    %1765 = vmatpush1.msra.mxu0 %v1753
    %1766 = vmatprep.subr.mxu0 0.0
    %1767 = vmatpush1.msra.mxu0 %v1754
    %1768 = vmatprep.subr.mxu0 0.0
    %1769 = vmatpush1.msra.mxu0 %v1755
    %1770 = vmatprep.subr.mxu0 0.0
    %1771 = vmatpush1.msra.mxu0 0.0
    %1772 = vmatprep.subr.mxu0 0.0
    %1773 = vmatpush1.msra.mxu0 0.0
    %1774 = vmatprep.subr.mxu0 0.0
    %1775 = vmatpush1.msra.mxu0 0.0
    %1776 = vmatprep.subr.mxu0 0.0
    %1777 = vmatpush1.msra.mxu0 0.0
    %1778 = vmatprep.subr.mxu0 0.0
    %1779 = vmatpush1.msra.mxu0 0.0
    %1780 = vmatprep.subr.mxu0 0.0
    %1781 = vmatpush1.msra.mxu0 0.0
    %1782 = vmatprep.subr.mxu0 0.0
    %1783 = vmatpush1.msra.mxu0 0.0
    %1784 = vmatprep.subr.mxu0 0.0
    %1785 = vmatpush1.msra.mxu0 0.0
    %1786 = vmatprep.subr.mxu0 0.0
    %1787 = vmatpush1.msra.mxu0 0.0
    %1788 = vmatprep.subr.mxu0 0.0
    %1789 = vmatpush1.msra.mxu0 0.0
    %1790 = vmatprep.subr.mxu0 0.0
    %1791 = vmatpush1.msra.mxu0 0.0
    %1792 = vmatprep.subr.mxu0 0.0
    %1793 = vmatpush1.msra.mxu0 0.0
    %1794 = vmatprep.subr.mxu0 0.0
    %1795 = vmatpush1.msra.mxu0 0.0
    %1796 = vmatprep.subr.mxu0 0.0
    %1797 = vmatpush1.msra.mxu0 0.0
    %1798 = vmatprep.subr.mxu0 0.0
    %1799 = vmatpush1.msra.mxu0 0.0
    %1800 = vmatprep.subr.mxu0 0.0
    %1801 = vmatpush1.msra.mxu0 0.0
    %1802 = vmatprep.subr.mxu0 0.0
    %1803 = vmatpush1.msra.mxu0 0.0
    %1804 = vmatprep.subr.mxu0 0.0
    %1805 = vmatpush1.msra.mxu0 0.0
    %1806 = vmatprep.subr.mxu0 0.0
    %1807 = vmatpush1.msra.mxu0 0.0
    %1808 = vmatprep.subr.mxu0 0.0
    %1809 = vmatpush1.msra.mxu0 0.0
    %1810 = vmatprep.subr.mxu0 0.0
    %1811 = vmatpush1.msra.mxu0 0.0
    %1812 = vmatprep.subr.mxu0 0.0
    %1813 = vmatpush1.msra.mxu0 0.0
    %1814 = vmatprep.subr.mxu0 0.0
    %1815 = vmatpush1.msra.mxu0 0.0
    %1816 = vmatprep.subr.mxu0 0.0
    %1817 = vmatpush1.msra.mxu0 0.0
    %1818 = vmatprep.subr.mxu0 0.0
    %1819 = vmatpush1.msra.mxu0 0.0
    %1820 = vmatprep.subr.mxu0 0.0
    %1821 = vmatpush1.msra.mxu0 0.0
    %1822 = vmatprep.subr.mxu0 0.0
    %1823 = vmatpush1.msra.mxu0 0.0
    %1824 = vmatprep.subr.mxu0 0.0
    %1825 = vmatpush1.msra.mxu0 0.0
    %1826 = vmatprep.mubr.f32.mxu0 0.0
    %1827 = vmatmul.mubr.f32.gmra.mrb[0].mxu0 %v1757
    %v1828 = vpop.f32.mrb[0].mxu0
    %v1829 = vadd.f32 0.0, %v1828
    %v1830 = vpop.f32.mrb[0].mxu0
    %1831 = vmatprep.mubr.f32.mxu0 0.0
    %1832 = vmatmul.mubr.f32.gmra.mrb[0].mxu0 %v1760
    %v1833 = vpop.f32.mrb[0].mxu0
    %v1834 = vadd.f32 0.0, %v1833
    %v1835 = vpop.f32.mrb[0].mxu0
    %1836 = vdwg.mxu0
    %v1837 = vadd.f32 %v1744, %v1829
    %v1838 = vadd.f32 %v1749, %v1834
    %v1839 = vld [vmem:[#allocation8] sm:$0x1]
    %v1840 = vld [vmem:[#allocation8 + $0x1] sm:$0x1]
    %v1843 = vlaneseq
    %v1844 = vshrl.u32 %v1843, 7
    %v1845 = vsub.s32 0, %v1844
    %v1846 = vrot.slane %v1839, %v1845
    %v1847 = vlaneseq
    %v1848 = vshrl.u32 %v1847, 7
    %v1849 = vsub.s32 0, %v1848
    %v1850 = vrot.slane %v1840, %v1849
    %v1853 = vadd.f32 %v1837, %v1846
    %v1854 = vadd.f32 %v1838, %v1850
    %v1855 = vsub.f32 0.0, %v1853
    %v1856 = vsub.f32 0.0, %v1854
    %v1857 = vmul.f32 %v1855, 1.442695
    %v1858 = vpow.pop %v1857
    %v1859 = vmul.f32 %v1856, 1.442695
    %v1860 = vpow.pop %v1859
    %v1861 = vadd.f32 %v1858, 1.0
    %v1862 = vadd.f32 %v1860, 1.0
    %v1863 = vrcp.pop %v1861
    %v1864 = vmul.f32 1.0, %v1863
    %v1865 = vrcp.pop %v1862
    %v1866 = vmul.f32 1.0, %v1865
    %1867 = vrot.lane.b32.xlu0 %v224, 32
    %v1868 = vpop.permute.xlu0 %1867
    %1869 = vrot.lane.b32.xlu0 %v225, 32
    %v1870 = vpop.permute.xlu0 %1869
    %v1873 = vmul.f32 %v1864, %v1868
    %v1874 = vmul.f32 %v1866, %v1870
    %v1875 = vld [vmem:[#allocation17] sm:$0xff]
    %v1876 = vld [vmem:[#allocation17 + $0x8] sm:$0xff]
    %v1877 = vld [vmem:[#allocation17 + $0x10] sm:$0xff]
    %v1878 = vld [vmem:[#allocation17 + $0x18] sm:$0xff]
    %v1879 = vld [vmem:[#allocation19] sm:$0xff]
    %v1880 = vld [vmem:[#allocation19 + $0x8] sm:$0xff]
    %v1881 = vld [vmem:[#allocation19 + $0x10] sm:$0xff]
    %v1882 = vld [vmem:[#allocation19 + $0x18] sm:$0xff]
    %1883 = vmatprep.subr.mxu0 0.0
    %1884 = vmatpush1.msra.mxu0 %v1879
    %1885 = vmatprep.subr.mxu0 0.0
    %1886 = vmatpush1.msra.mxu0 %v1880
    %1887 = vmatprep.subr.mxu0 0.0
    %1888 = vmatpush1.msra.mxu0 %v1881
    %1889 = vmatprep.subr.mxu0 0.0
    %1890 = vmatpush1.msra.mxu0 %v1882
    %1891 = vmatprep.subr.mxu0 0.0
    %1892 = vmatpush1.msra.mxu0 0.0
    %1893 = vmatprep.subr.mxu0 0.0
    %1894 = vmatpush1.msra.mxu0 0.0
    %1895 = vmatprep.subr.mxu0 0.0
    %1896 = vmatpush1.msra.mxu0 0.0
    %1897 = vmatprep.subr.mxu0 0.0
    %1898 = vmatpush1.msra.mxu0 0.0
    %1899 = vmatprep.subr.mxu0 0.0
    %1900 = vmatpush1.msra.mxu0 0.0
    %1901 = vmatprep.subr.mxu0 0.0
    %1902 = vmatpush1.msra.mxu0 0.0
    %1903 = vmatprep.subr.mxu0 0.0
    %1904 = vmatpush1.msra.mxu0 0.0
    %1905 = vmatprep.subr.mxu0 0.0
    %1906 = vmatpush1.msra.mxu0 0.0
    %1907 = vmatprep.subr.mxu0 0.0
    %1908 = vmatpush1.msra.mxu0 0.0
    %1909 = vmatprep.subr.mxu0 0.0
    %1910 = vmatpush1.msra.mxu0 0.0
    %1911 = vmatprep.subr.mxu0 0.0
    %1912 = vmatpush1.msra.mxu0 0.0
    %1913 = vmatprep.subr.mxu0 0.0
    %1914 = vmatpush1.msra.mxu0 0.0
    %1915 = vmatprep.subr.mxu0 0.0
    %1916 = vmatpush1.msra.mxu0 0.0
    %1917 = vmatprep.subr.mxu0 0.0
    %1918 = vmatpush1.msra.mxu0 0.0
    %1919 = vmatprep.subr.mxu0 0.0
    %1920 = vmatpush1.msra.mxu0 0.0
    %1921 = vmatprep.subr.mxu0 0.0
    %1922 = vmatpush1.msra.mxu0 0.0
    %1923 = vmatprep.subr.mxu0 0.0
    %1924 = vmatpush1.msra.mxu0 0.0
    %1925 = vmatprep.subr.mxu0 0.0
    %1926 = vmatpush1.msra.mxu0 0.0
    %1927 = vmatprep.subr.mxu0 0.0
    %1928 = vmatpush1.msra.mxu0 0.0
    %1929 = vmatprep.subr.mxu0 0.0
    %1930 = vmatpush1.msra.mxu0 0.0
    %1931 = vmatprep.subr.mxu0 0.0
    %1932 = vmatpush1.msra.mxu0 0.0
    %1933 = vmatprep.subr.mxu0 0.0
    %1934 = vmatpush1.msra.mxu0 0.0
    %1935 = vmatprep.subr.mxu0 0.0
    %1936 = vmatpush1.msra.mxu0 0.0
    %1937 = vmatprep.subr.mxu0 0.0
    %1938 = vmatpush1.msra.mxu0 0.0
    %1939 = vmatprep.subr.mxu0 0.0
    %1940 = vmatpush1.msra.mxu0 0.0
    %1941 = vmatprep.subr.mxu0 0.0
    %1942 = vmatpush1.msra.mxu0 0.0
    %1943 = vmatprep.subr.mxu0 0.0
    %1944 = vmatpush1.msra.mxu0 0.0
    %1945 = vmatprep.subr.mxu0 0.0
    %1946 = vmatpush1.msra.mxu0 0.0
    %1947 = vmatprep.mubr.f32.mxu0 0.0
    %1948 = vmatmul.mubr.f32.gmra.mrb[0].mxu0 %v1591
    %v1949 = vpop.f32.mrb[0].mxu0
    %v1950 = vadd.f32 0.0, %v1949
    %v1951 = vpop.f32.mrb[0].mxu0
    %1952 = vmatprep.mubr.f32.mxu0 0.0
    %1953 = vmatmul.mubr.f32.gmra.mrb[0].mxu0 %v1594
    %v1954 = vpop.f32.mrb[0].mxu0
    %v1955 = vadd.f32 0.0, %v1954
    %v1956 = vpop.f32.mrb[0].mxu0
    %1957 = vdwg.mxu0
    %1960 = vrot.lane.b32.xlu0 %v1873, 96
    %v1961 = vpop.permute.xlu0 %1960
    %1962 = vrot.lane.b32.xlu0 %v1874, 96
    %v1963 = vpop.permute.xlu0 %1962
    %v1964 = vsel %vm234, %v1961, 0
    %v1966 = vsel %vm234, %v1963, 0
    %1968 = vmatprep.subr.mxu0 0.0
    %1969 = vmatpush1.msra.mxu0 %v1875
    %1970 = vmatprep.subr.mxu0 0.0
    %1971 = vmatpush1.msra.mxu0 %v1876
    %1972 = vmatprep.subr.mxu0 0.0
    %1973 = vmatpush1.msra.mxu0 %v1877
    %1974 = vmatprep.subr.mxu0 0.0
    %1975 = vmatpush1.msra.mxu0 %v1878
    %1976 = vmatprep.subr.mxu0 0.0
    %1977 = vmatpush1.msra.mxu0 0.0
    %1978 = vmatprep.subr.mxu0 0.0
    %1979 = vmatpush1.msra.mxu0 0.0
    %1980 = vmatprep.subr.mxu0 0.0
    %1981 = vmatpush1.msra.mxu0 0.0
    %1982 = vmatprep.subr.mxu0 0.0
    %1983 = vmatpush1.msra.mxu0 0.0
    %1984 = vmatprep.subr.mxu0 0.0
    %1985 = vmatpush1.msra.mxu0 0.0
    %1986 = vmatprep.subr.mxu0 0.0
    %1987 = vmatpush1.msra.mxu0 0.0
    %1988 = vmatprep.subr.mxu0 0.0
    %1989 = vmatpush1.msra.mxu0 0.0
    %1990 = vmatprep.subr.mxu0 0.0
    %1991 = vmatpush1.msra.mxu0 0.0
    %1992 = vmatprep.subr.mxu0 0.0
    %1993 = vmatpush1.msra.mxu0 0.0
    %1994 = vmatprep.subr.mxu0 0.0
    %1995 = vmatpush1.msra.mxu0 0.0
    %1996 = vmatprep.subr.mxu0 0.0
    %1997 = vmatpush1.msra.mxu0 0.0
    %1998 = vmatprep.subr.mxu0 0.0
    %1999 = vmatpush1.msra.mxu0 0.0
    %2000 = vmatprep.subr.mxu0 0.0
    %2001 = vmatpush1.msra.mxu0 0.0
    %2002 = vmatprep.subr.mxu0 0.0
    %2003 = vmatpush1.msra.mxu0 0.0
    %2004 = vmatprep.subr.mxu0 0.0
    %2005 = vmatpush1.msra.mxu0 0.0
    %2006 = vmatprep.subr.mxu0 0.0
    %2007 = vmatpush1.msra.mxu0 0.0
    %2008 = vmatprep.subr.mxu0 0.0
    %2009 = vmatpush1.msra.mxu0 0.0
    %2010 = vmatprep.subr.mxu0 0.0
    %2011 = vmatpush1.msra.mxu0 0.0
    %2012 = vmatprep.subr.mxu0 0.0
    %2013 = vmatpush1.msra.mxu0 0.0
    %2014 = vmatprep.subr.mxu0 0.0
    %2015 = vmatpush1.msra.mxu0 0.0
    %2016 = vmatprep.subr.mxu0 0.0
    %2017 = vmatpush1.msra.mxu0 0.0
    %2018 = vmatprep.subr.mxu0 0.0
    %2019 = vmatpush1.msra.mxu0 0.0
    %2020 = vmatprep.subr.mxu0 0.0
    %2021 = vmatpush1.msra.mxu0 0.0
    %2022 = vmatprep.subr.mxu0 0.0
    %2023 = vmatpush1.msra.mxu0 0.0
    %2024 = vmatprep.subr.mxu0 0.0
    %2025 = vmatpush1.msra.mxu0 0.0
    %2026 = vmatprep.subr.mxu0 0.0
    %2027 = vmatpush1.msra.mxu0 0.0
    %2028 = vmatprep.subr.mxu0 0.0
    %2029 = vmatpush1.msra.mxu0 0.0
    %2030 = vmatprep.subr.mxu0 0.0
    %2031 = vmatpush1.msra.mxu0 0.0
    %2032 = vmatprep.mubr.f32.mxu0 0.0
    %2033 = vmatmul.mubr.f32.gmra.mrb[0].mxu0 %v1964
    %v2034 = vpop.f32.mrb[0].mxu0
    %v2035 = vadd.f32 %v1950, %v2034
    %v2036 = vpop.f32.mrb[0].mxu0
    %2037 = vmatprep.mubr.f32.mxu0 0.0
    %2038 = vmatmul.mubr.f32.gmra.mrb[0].mxu0 %v1966
    %v2039 = vpop.f32.mrb[0].mxu0
    %v2040 = vadd.f32 %v1955, %v2039
    %v2041 = vpop.f32.mrb[0].mxu0
    %2042 = vdwg.mxu0
    %v2043 = vld [vmem:[#allocation20] sm:$0xff]
    %v2044 = vld [vmem:[#allocation20 + $0x8] sm:$0xff]
    %v2045 = vld [vmem:[#allocation20 + $0x10] sm:$0xff]
    %v2046 = vld [vmem:[#allocation20 + $0x18] sm:$0xff]
    %2047 = vmatprep.subr.mxu0 0.0
    %2048 = vmatpush1.msra.mxu0 %v2043
    %2049 = vmatprep.subr.mxu0 0.0
    %2050 = vmatpush1.msra.mxu0 %v2044
    %2051 = vmatprep.subr.mxu0 0.0
    %2052 = vmatpush1.msra.mxu0 %v2045
    %2053 = vmatprep.subr.mxu0 0.0
    %2054 = vmatpush1.msra.mxu0 %v2046
    %2055 = vmatprep.subr.mxu0 0.0
    %2056 = vmatpush1.msra.mxu0 0.0
    %2057 = vmatprep.subr.mxu0 0.0
    %2058 = vmatpush1.msra.mxu0 0.0
    %2059 = vmatprep.subr.mxu0 0.0
    %2060 = vmatpush1.msra.mxu0 0.0
    %2061 = vmatprep.subr.mxu0 0.0
    %2062 = vmatpush1.msra.mxu0 0.0
    %2063 = vmatprep.subr.mxu0 0.0
    %2064 = vmatpush1.msra.mxu0 0.0
    %2065 = vmatprep.subr.mxu0 0.0
    %2066 = vmatpush1.msra.mxu0 0.0
    %2067 = vmatprep.subr.mxu0 0.0
    %2068 = vmatpush1.msra.mxu0 0.0
    %2069 = vmatprep.subr.mxu0 0.0
    %2070 = vmatpush1.msra.mxu0 0.0
    %2071 = vmatprep.subr.mxu0 0.0
    %2072 = vmatpush1.msra.mxu0 0.0
    %2073 = vmatprep.subr.mxu0 0.0
    %2074 = vmatpush1.msra.mxu0 0.0
    %2075 = vmatprep.subr.mxu0 0.0
    %2076 = vmatpush1.msra.mxu0 0.0
    %2077 = vmatprep.subr.mxu0 0.0
    %2078 = vmatpush1.msra.mxu0 0.0
    %2079 = vmatprep.subr.mxu0 0.0
    %2080 = vmatpush1.msra.mxu0 0.0
    %2081 = vmatprep.subr.mxu0 0.0
    %2082 = vmatpush1.msra.mxu0 0.0
    %2083 = vmatprep.subr.mxu0 0.0
    %2084 = vmatpush1.msra.mxu0 0.0
    %2085 = vmatprep.subr.mxu0 0.0
    %2086 = vmatpush1.msra.mxu0 0.0
    %2087 = vmatprep.subr.mxu0 0.0
    %2088 = vmatpush1.msra.mxu0 0.0
    %2089 = vmatprep.subr.mxu0 0.0
    %2090 = vmatpush1.msra.mxu0 0.0
    %2091 = vmatprep.subr.mxu0 0.0
    %2092 = vmatpush1.msra.mxu0 0.0
    %2093 = vmatprep.subr.mxu0 0.0
    %2094 = vmatpush1.msra.mxu0 0.0
    %2095 = vmatprep.subr.mxu0 0.0
    %2096 = vmatpush1.msra.mxu0 0.0
    %2097 = vmatprep.subr.mxu0 0.0
    %2098 = vmatpush1.msra.mxu0 0.0
    %2099 = vmatprep.subr.mxu0 0.0
    %2100 = vmatpush1.msra.mxu0 0.0
    %2101 = vmatprep.subr.mxu0 0.0
    %2102 = vmatpush1.msra.mxu0 0.0
    %2103 = vmatprep.subr.mxu0 0.0
    %2104 = vmatpush1.msra.mxu0 0.0
    %2105 = vmatprep.subr.mxu0 0.0
    %2106 = vmatpush1.msra.mxu0 0.0
    %2107 = vmatprep.subr.mxu0 0.0
    %2108 = vmatpush1.msra.mxu0 0.0
    %2109 = vmatprep.subr.mxu0 0.0
    %2110 = vmatpush1.msra.mxu0 0.0
    %2111 = vmatprep.mubr.f32.mxu0 0.0
    %2112 = vmatmul.mubr.f32.gmra.mrb[0].mxu0 %v1757
    %v2113 = vpop.f32.mrb[0].mxu0
    %v2114 = vadd.f32 0.0, %v2113
    %v2115 = vpop.f32.mrb[0].mxu0
    %2116 = vmatprep.mubr.f32.mxu0 0.0
    %2117 = vmatmul.mubr.f32.gmra.mrb[0].mxu0 %v1760
    %v2118 = vpop.f32.mrb[0].mxu0
    %v2119 = vadd.f32 0.0, %v2118
    %v2120 = vpop.f32.mrb[0].mxu0
    %2121 = vdwg.mxu0
    %v2122 = vadd.f32 %v2035, %v2114
    %v2123 = vadd.f32 %v2040, %v2119
    %v2124 = vld [vmem:[#allocation10] sm:$0x1]
    %v2125 = vld [vmem:[#allocation10 + $0x1] sm:$0x1]
    %v2128 = vlaneseq
    %v2129 = vshrl.u32 %v2128, 7
    %v2130 = vsub.s32 0, %v2129
    %v2131 = vrot.slane %v2124, %v2130
    %v2132 = vlaneseq
    %v2133 = vshrl.u32 %v2132, 7
    %v2134 = vsub.s32 0, %v2133
    %v2135 = vrot.slane %v2125, %v2134
    %v2138 = vadd.f32 %v2122, %v2131
    %v2139 = vadd.f32 %v2123, %v2135
    %v2140 = vtanh.pop %v2138
    %v2141 = vtanh.pop %v2139
    %v2142 = vsub.f32 1.0, %v1864
    %v2143 = vsub.f32 1.0, %v1866
    %v2144 = vmul.f32 %v2142, %v224
    %v2145 = vmul.f32 %v2143, %v225
    %v2146 = vmul.f32 %v1864, %v2140
    %v2147 = vmul.f32 %v1866, %v2141
    %v2148 = vadd.f32 %v2144, %v2146
    %v2149 = vadd.f32 %v2145, %v2147
    %2150 = vst.msk [vmem:[#allocation22] sm:$0xff] %vm234, %v2148
    %2151 = vst.msk [vmem:[#allocation22 + $0x8] sm:$0xff] %vm234, %v2149
    // Predicated region
    $region126: #{tpu_custom_call.1} parent=1 // pred_check
      _
    $region127: #{tpu_custom_call.1} parent=1 // pred_check_branch
      %2153 = sbr.rel (0) target = $region129
    $region128: #{tpu_custom_call.1} parent=1 // pred_region
      %s2155 = ssub.s32 256, 256
      %2156 = vsyncadd [#allocation4], %s2155
      %s2157 = sshll.u32 [#allocation22], 4
      %s2158 = int_to_ptr.vmem [resolvable:$true] %s2157
      %2163 = dma.vmem_to_hbm [thread:$0]  %s2158, 256, %s19, [#allocation4], 128, 128, 8
    $region129: #{tpu_custom_call.1} parent=1 // pred_fallthru
      _
    // Predicated region
    $region130: #{tpu_custom_call.1} parent=1 // pred_check
      _
    $region131: #{tpu_custom_call.1} parent=1 // pred_check_branch
      %2165 = sbr.rel (0) target = $region133
    $region132: #{tpu_custom_call.1} parent=1 // pred_region
      %2166 = dma.done [#allocation4], 256
    $region133: #{tpu_custom_call.1} parent=1 // pred_fallthru
      _
    %2167 = vsyncpa [#allocation3], 1
    %2168 = vsyncpa [#allocation6], 1
    %2169 = vsyncpa [#allocation9], 1
    %2170 = vsyncpa [#allocation12], 1
    %2171 = vsyncpa [#allocation15], 1
    %2172 = vsyncpa [#allocation18], 1
    %2173 = vsyncpa [#allocation21], 1
    %2174 = vsyncpa [#allocation4], 1

</llo_original>
